<compile_context>
chip_gen: v6e
topology: v6e:2x2x1
jax: 0.10.0
libtpu: 0.0.40
codegen_flags: <defaults>
</compile_context>

<pallas_src>
import functools

import jax
import jax.numpy as jnp
from jax import lax
from jax.experimental import pallas as pl
from jax.experimental.pallas import tpu as pltpu


def _mha_kernel(x_ref, wq_ref, wkv_ref, wp_ref, bp_ref, o_ref,
                k_ref, v_ref, m_ref, l_ref, acc_ref,
                *, scale, n_head, head_size, tq, tk):
    """Grid = (B, num_q_tiles). One invocation = one (batch, query-tile).

    x_ref   : (1, T, C)   full sequence for this batch row
    wq_ref  : (C, C)      fused per-head query weights (columns head-major)
    wkv_ref : (C, 2C)     fused key|value weights
    wp_ref  : (C, C)      output-projection weight (rows head-major)
    bp_ref  : (1, C)      output-projection bias
    o_ref   : (1, tq, C)  output tile
    k_ref   : (T, C)      cached K for the whole row (computed at qi == 0)
    v_ref   : (T, C)      cached V for the whole row (computed at qi == 0)
    m_ref   : (tq, H) f32 running row max per head   (online softmax)
    l_ref   : (tq, H) f32 running denominator per head
    acc_ref : (tq, C) f32 running numerator, laid out as concat(head outputs)
    """
    qi = pl.program_id(1)
    C = x_ref.shape[2]
    H, hs = n_head, head_size
    in_dtype = x_ref.dtype

    # ---- K/V projection for the WHOLE row, once per batch row -------------
    # The query-tile grid axis is "arbitrary" (sequential), so this scratch
    # persists and is reused by every query tile of this batch row.
    @pl.when(qi == 0)
    def _():
        kv = jnp.dot(x_ref[0], wkv_ref[...],
                     preferred_element_type=jnp.float32)       # (T, 2C)
        k_ref[...] = kv[:, :C].astype(k_ref.dtype)
        v_ref[...] = kv[:, C:].astype(v_ref.dtype)

    # ---- Q projection for this query tile, scale folded in ----------------
    q_start = pl.multiple_of(qi * tq, tq)
    xq = x_ref[0, pl.ds(q_start, tq), :]
    q = jnp.dot(xq, wq_ref[...], preferred_element_type=jnp.float32)
    q = (q * scale).astype(in_dtype)   # keep bf16 MXU operands if inputs are bf16

    # ---- online-softmax state (fully re-initialized every grid step) ------
    m_ref[...] = jnp.full_like(m_ref, -jnp.inf)
    l_ref[...] = jnp.zeros_like(l_ref)
    acc_ref[...] = jnp.zeros_like(acc_ref)

    def make_kv_step(masked):
        def body(kvi, carry):
            k_start = pl.multiple_of(kvi * tk, tk)
            k = k_ref[pl.ds(k_start, tk), :]
            v = v_ref[pl.ds(k_start, tk), :]
            if masked:
                # Only the diagonal tile ever needs the causal mask.
                qpos = qi * tq + lax.broadcasted_iota(jnp.int32, (tq, tk), 0)
                kpos = k_start + lax.broadcasted_iota(jnp.int32, (tq, tk), 1)
                causal = kpos <= qpos

            for h in range(H):                   # static unroll over heads
                lo, hi = h * hs, (h + 1) * hs
                s = lax.dot_general(q[:, lo:hi], k[:, lo:hi],
                                    (((1,), (1,)), ((), ())),
                                    preferred_element_type=jnp.float32)
                if masked:
                    s = jnp.where(causal, s, -jnp.inf)

                m_prev = m_ref[:, h:h + 1]                            # (tq, 1)
                m_new = jnp.maximum(m_prev, jnp.max(s, axis=-1, keepdims=True))
                alpha = jnp.exp(m_prev - m_new)
                p = jnp.exp(s - m_new)                                # (tq, tk)
                l_ref[:, h:h + 1] = alpha * l_ref[:, h:h + 1] + jnp.sum(
                    p, axis=-1, keepdims=True)
                acc_ref[:, lo:hi] = alpha * acc_ref[:, lo:hi] + jnp.dot(
                    p.astype(v.dtype), v[:, lo:hi],
                    preferred_element_type=jnp.float32)
                m_ref[:, h:h + 1] = m_new
            return carry
        return body

    # Causal tile skipping: only KV tiles 0..qi are needed (tk == tq).
    # Bulk tiles (strictly below the diagonal) run without any mask compute;
    # the diagonal tile is peeled out and applies the mask.
    lax.fori_loop(0, qi, make_kv_step(False), 0)
    make_kv_step(True)(qi, 0)

    # ---- normalize (1/l on the EUP) + single full-width output projection --
    inv_l = pl.reciprocal(l_ref[...], approx=True)                    # (tq, H)
    for h in range(H):
        lo, hi = h * hs, (h + 1) * hs
        acc_ref[:, lo:hi] = acc_ref[:, lo:hi] * inv_l[:, h:h + 1]

    attn = acc_ref[...].astype(wp_ref.dtype)        # == concat(head outputs)
    out = jnp.dot(attn, wp_ref[...], preferred_element_type=jnp.float32)
    out = out + bp_ref[...]
    o_ref[0] = out.astype(o_ref.dtype)


def multi_head_attention(x, wq, wk, wv, wp, bp, *, q_tile=None):
    """x: (B, T, C); wq/wk/wv: (H, C, hs); wp: (H, hs, C); bp: (C,)."""
    B, T, C = x.shape
    H, _, hs = wq.shape
    assert H * hs == C, "n_head * head_size must equal n_embd"

    if q_tile is None:
        q_tile = T if T <= 256 else next(
            (t for t in (256, 128, 64, 32, 16, 8) if T % t == 0), T)
    assert T % q_tile == 0
    assert q_tile == T or q_tile % 8 == 0
    nq = T // q_tile

    # One-time layout plumbing (plain JAX, outside the kernel): fuse per-head
    # projection weights into full-width matmul operands.
    wq_f = jnp.transpose(wq, (1, 0, 2)).reshape(C, C)        # (C, H*hs)
    wk_f = jnp.transpose(wk, (1, 0, 2)).reshape(C, C)
    wv_f = jnp.transpose(wv, (1, 0, 2)).reshape(C, C)
    wkv_f = jnp.concatenate([wk_f, wv_f], axis=-1)           # (C, 2C)
    wp_f = wp.reshape(C, C)                                  # (H*hs, C)
    bp2 = bp.reshape(1, C)

    kernel = functools.partial(
        _mha_kernel, scale=float(C) ** -0.5, n_head=H, head_size=hs,
        tq=q_tile, tk=q_tile)

    return pl.pallas_call(
        kernel,
        out_shape=jax.ShapeDtypeStruct((B, T, C), x.dtype),
        grid_spec=pltpu.PrefetchScalarGridSpec(
            num_scalar_prefetch=0,
            grid=(B, nq),
            in_specs=[
                pl.BlockSpec((1, T, C), lambda b, qi: (b, 0, 0)),     # x
                pl.BlockSpec((C, C), lambda b, qi: (0, 0)),           # wq fused
                pl.BlockSpec((C, 2 * C), lambda b, qi: (0, 0)),       # w[k|v]
                pl.BlockSpec((C, C), lambda b, qi: (0, 0)),           # wp
                pl.BlockSpec((1, C), lambda b, qi: (0, 0)),           # bias
            ],
            out_specs=pl.BlockSpec((1, q_tile, C), lambda b, qi: (b, qi, 0)),
            scratch_shapes=[
                pltpu.VMEM((T, C), x.dtype),            # cached K (per row)
                pltpu.VMEM((T, C), x.dtype),            # cached V (per row)
                pltpu.VMEM((q_tile, H), jnp.float32),   # running max   m
                pltpu.VMEM((q_tile, H), jnp.float32),   # running denom l
                pltpu.VMEM((q_tile, C), jnp.float32),   # concat head outputs
            ],
        ),
        compiler_params=pltpu.CompilerParams(
            # qi must be sequential: K/V scratch is filled at qi == 0 and
            # reused by later query tiles of the same batch row.
            dimension_semantics=("parallel", "arbitrary"),
            vmem_limit_bytes=64 * 1024 * 1024),
    )(x, wq_f, wkv_f, wp_f, bp2)


def _reference(x, wq, wk, wv, wp, bp):
    """Pure-JAX reference mirroring the PyTorch module (eval / dropout=0)."""
    B, T, C = x.shape
    q = jnp.einsum('btc,hcd->bhtd', x, wq)
    k = jnp.einsum('btc,hcd->bhtd', x, wk)
    v = jnp.einsum('btc,hcd->bhtd', x, wv)
    wei = jnp.einsum('bhtd,bhsd->bhts', q, k) * (C ** -0.5)
    mask = jnp.tril(jnp.ones((T, T), dtype=bool))
    wei = jnp.where(mask, wei, -jnp.inf)
    wei = jax.nn.softmax(wei, axis=-1)
    out = jnp.einsum('bhts,bhsd->bhtd', wei, v)           # (B, H, T, hs)
    contrib = jnp.einsum('bhtd,hdc->btc', out, wp)        # sum over heads == concat @ Wp
    return contrib + bp[None, None, :]


if __name__ == "__main__":
    # small, module-consistent shapes; q_tile=8 < T exercises the multi-tile
    # flash path (online softmax + causal tile skipping + cached K/V reuse).
    B, T = 2, 16                # batch, sequence (== block_size)
    n_embd, n_head = 32, 4
    head_size = n_embd // n_head   # 8
    dropout = 0.0

    key = jax.random.PRNGKey(0)
    kx, kq, kk, kv, kp, kb = jax.random.split(key, 6)

    x = jax.random.normal(kx, (B, T, n_embd), dtype=jnp.float32)
    # per-head projection weights, stored as (H, C, head_size) (right-multiply layout)
    wq = jax.random.normal(kq, (n_head, n_embd, head_size), dtype=jnp.float32) * 0.1
    wk = jax.random.normal(kk, (n_head, n_embd, head_size), dtype=jnp.float32) * 0.1
    wv = jax.random.normal(kv, (n_head, n_embd, head_size), dtype=jnp.float32) * 0.1
    # output projection: (n_embd -> n_embd), stored as (H, head_size, n_embd)
    wp = jax.random.normal(kp, (n_head, head_size, n_embd), dtype=jnp.float32) * 0.1
    bp = jax.random.normal(kb, (n_embd,), dtype=jnp.float32) * 0.1

    out = multi_head_attention(x, wq, wk, wv, wp, bp, q_tile=8)
    out = jax.block_until_ready(out)

    ref = _reference(x, wq, wk, wv, wp, bp)
    assert out.shape == (B, T, n_embd)
    # tolerance accounts for the approximate (EUP) reciprocal in the softmax
    assert jnp.allclose(out, ref, atol=1e-3, rtol=1e-3), (
        f"mismatch vs reference: max abs err {jnp.max(jnp.abs(out - ref))}")

    print("KERNEL_OK")
</pallas_src>

<mosaic_0001>
module attributes {stable_mosaic.version = 11 : i64} {
  func.func @_mha_kernel(%arg0: i32, %arg1: i32, %arg2: memref<1x16x32xf32, #tpu.memory_space<vmem>>, %arg3: memref<32x32xf32, #tpu.memory_space<vmem>>, %arg4: memref<32x64xf32, #tpu.memory_space<vmem>>, %arg5: memref<32x32xf32, #tpu.memory_space<vmem>>, %arg6: memref<1x32xf32, #tpu.memory_space<vmem>>, %arg7: memref<1x8x32xf32, #tpu.memory_space<vmem>>, %arg8: memref<16x32xf32, #tpu.memory_space<vmem>>, %arg9: memref<16x32xf32, #tpu.memory_space<vmem>>, %arg10: memref<8x4xf32, #tpu.memory_space<vmem>>, %arg11: memref<8x4xf32, #tpu.memory_space<vmem>>, %arg12: memref<8x32xf32, #tpu.memory_space<vmem>>) attributes {dimension_semantics = [#tpu.dimension_semantics<parallel>, #tpu.dimension_semantics<arbitrary>], iteration_bounds = array<i64: 2, 2>, scalar_prefetch = 0 : i64, scratch_operands = 5 : i64, tpu.core_type = #tpu.core_type<tc>, window_params = [{transform_indices = @transform_0, window_bounds = array<i64: 1, 16, 32>}, {pipeline_mode = #tpu.pipeline_mode<synchronous>, transform_indices = @transform_1, window_bounds = array<i64: 32, 32>}, {pipeline_mode = #tpu.pipeline_mode<synchronous>, transform_indices = @transform_2, window_bounds = array<i64: 32, 64>}, {pipeline_mode = #tpu.pipeline_mode<synchronous>, transform_indices = @transform_3, window_bounds = array<i64: 32, 32>}, {pipeline_mode = #tpu.pipeline_mode<synchronous>, transform_indices = @transform_4, window_bounds = array<i64: 1, 32>}, {transform_indices = @transform_5, window_bounds = array<i64: 1, 8, 32>}]} {
    %c0_i32 = arith.constant 0 : i32
    %0 = arith.cmpi eq, %arg1, %c0_i32 : i32
    %1 = arith.extui %0 : i1 to i32
    %c0_i32_0 = arith.constant 0 : i32
    %2 = arith.cmpi ne, %1, %c0_i32_0 : i32
    scf.if %2 {
      %c0_110 = arith.constant 0 : index
      %c0_111 = arith.constant 0 : index
      %c0_112 = arith.constant 0 : index
      %177 = vector.load %arg2[%c0_110, %c0_111, %c0_112] : memref<1x16x32xf32, #tpu.memory_space<vmem>>, vector<1x16x32xf32>
      %178 = vector.shape_cast %177 : vector<1x16x32xf32> to vector<16x32xf32>
      %c0_113 = arith.constant 0 : index
      %c0_114 = arith.constant 0 : index
      %179 = vector.load %arg4[%c0_113, %c0_114] : memref<32x64xf32, #tpu.memory_space<vmem>>, vector<32x64xf32>
      %cst_115 = arith.constant dense<0.000000e+00> : vector<16x64xf32>
      %180 = tpu.matmul %178, %179, %cst_115 {dimension_numbers = #tpu.dot_dimension_numbers<[1], [0], [0], [1], [0, 0, 1, 1], [], []>} : vector<16x32xf32>, vector<32x64xf32>, vector<16x64xf32> -> vector<16x64xf32>
      %181 = vector.extract_strided_slice %180 {offsets = [0, 0], sizes = [16, 32], strides = [1, 1]} : vector<16x64xf32> to vector<16x32xf32>
      %c0_116 = arith.constant 0 : index
      %c0_117 = arith.constant 0 : index
      %182 = vector.load %arg8[%c0_116, %c0_117] : memref<16x32xf32, #tpu.memory_space<vmem>>, vector<16x32xf32>
      tpu.vector_store %arg8[%c0_116, %c0_117], %181 {strides = array<i32>} : memref<16x32xf32, #tpu.memory_space<vmem>>, vector<16x32xf32>,
      %183 = vector.extract_strided_slice %180 {offsets = [0, 32], sizes = [16, 32], strides = [1, 1]} : vector<16x64xf32> to vector<16x32xf32>
      %c0_118 = arith.constant 0 : index
      %c0_119 = arith.constant 0 : index
      %184 = vector.load %arg9[%c0_118, %c0_119] : memref<16x32xf32, #tpu.memory_space<vmem>>, vector<16x32xf32>
      tpu.vector_store %arg9[%c0_118, %c0_119], %183 {strides = array<i32>} : memref<16x32xf32, #tpu.memory_space<vmem>>, vector<16x32xf32>,
    } else {
    }
    %c8_i32 = arith.constant 8 : i32
    %3 = arith.muli %arg1, %c8_i32 : i32
    %4 = tpu.assume_multiple %3, 8 : i32
    %c0 = arith.constant 0 : index
    %5 = arith.index_cast %4 : i32 to index
    %c0_1 = arith.constant 0 : index
    %6 = vector.load %arg2[%c0, %5, %c0_1] : memref<1x16x32xf32, #tpu.memory_space<vmem>>, vector<1x8x32xf32>
    %7 = vector.shape_cast %6 : vector<1x8x32xf32> to vector<8x32xf32>
    %c0_2 = arith.constant 0 : index
    %c0_3 = arith.constant 0 : index
    %8 = vector.load %arg3[%c0_2, %c0_3] : memref<32x32xf32, #tpu.memory_space<vmem>>, vector<32x32xf32>
    %cst = arith.constant dense<0.000000e+00> : vector<8x32xf32>
    %9 = tpu.matmul %7, %8, %cst {dimension_numbers = #tpu.dot_dimension_numbers<[1], [0], [0], [1], [0, 0, 1, 1], [], []>} : vector<8x32xf32>, vector<32x32xf32>, vector<8x32xf32> -> vector<8x32xf32>
    %cst_4 = arith.constant 0.176776692 : f32
    %10 = vector.broadcast %cst_4 : f32 to vector<8x32xf32>
    %11 = arith.mulf %9, %10 : vector<8x32xf32>
    %cst_5 = arith.constant 0xFF800000 : f32
    %12 = vector.broadcast %cst_5 : f32 to vector<8x4xf32>
    %c0_6 = arith.constant 0 : index
    %c0_7 = arith.constant 0 : index
    %13 = vector.load %arg10[%c0_6, %c0_7] : memref<8x4xf32, #tpu.memory_space<vmem>>, vector<8x4xf32>
    tpu.vector_store %arg10[%c0_6, %c0_7], %12 {strides = array<i32>} : memref<8x4xf32, #tpu.memory_space<vmem>>, vector<8x4xf32>,
    %cst_8 = arith.constant 0.000000e+00 : f32
    %14 = vector.broadcast %cst_8 : f32 to vector<8x4xf32>
    %c0_9 = arith.constant 0 : index
    %c0_10 = arith.constant 0 : index
    %15 = vector.load %arg11[%c0_9, %c0_10] : memref<8x4xf32, #tpu.memory_space<vmem>>, vector<8x4xf32>
    tpu.vector_store %arg11[%c0_9, %c0_10], %14 {strides = array<i32>} : memref<8x4xf32, #tpu.memory_space<vmem>>, vector<8x4xf32>,
    %cst_11 = arith.constant 0.000000e+00 : f32
    %16 = vector.broadcast %cst_11 : f32 to vector<8x32xf32>
    %c0_12 = arith.constant 0 : index
    %c0_13 = arith.constant 0 : index
    %17 = vector.load %arg12[%c0_12, %c0_13] : memref<8x32xf32, #tpu.memory_space<vmem>>, vector<8x32xf32>
    tpu.vector_store %arg12[%c0_12, %c0_13], %16 {strides = array<i32>} : memref<8x32xf32, #tpu.memory_space<vmem>>, vector<8x32xf32>,
    %c0_i32_14 = arith.constant 0 : i32
    %c0_i32_15 = arith.constant 0 : i32
    %18 = arith.subi %arg1, %c0_i32_15 : i32
    %19 = arith.addi %c0_i32_15, %18 : i32
    %c1_i32 = arith.constant 1 : i32
    scf.for %arg13 = %c0_i32_15 to %19 step %c1_i32  : i32 {
      %c8_i32_110 = arith.constant 8 : i32
      %177 = arith.muli %arg13, %c8_i32_110 : i32
      %178 = tpu.assume_multiple %177, 8 : i32
      %179 = arith.index_cast %178 : i32 to index
      %c0_111 = arith.constant 0 : index
      %180 = vector.load %arg8[%179, %c0_111] : memref<16x32xf32, #tpu.memory_space<vmem>>, vector<8x32xf32>
      %181 = arith.index_cast %178 : i32 to index
      %c0_112 = arith.constant 0 : index
      %182 = vector.load %arg9[%181, %c0_112] : memref<16x32xf32, #tpu.memory_space<vmem>>, vector<8x32xf32>
      %183 = vector.extract_strided_slice %11 {offsets = [0, 0], sizes = [8, 8], strides = [1, 1]} : vector<8x32xf32> to vector<8x8xf32>
      %184 = vector.extract_strided_slice %180 {offsets = [0, 0], sizes = [8, 8], strides = [1, 1]} : vector<8x32xf32> to vector<8x8xf32>
      %cst_113 = arith.constant dense<0.000000e+00> : vector<8x8xf32>
      %185 = tpu.matmul %183, %184, %cst_113 {dimension_numbers = #tpu.dot_dimension_numbers<[1], [1], [0], [0], [0, 0, 1, 0], [], []>} : vector<8x8xf32>, vector<8x8xf32>, vector<8x8xf32> -> vector<8x8xf32>
      %c0_114 = arith.constant 0 : index
      %c0_115 = arith.constant 0 : index
      %186 = vector.load %arg10[%c0_114, %c0_115] : memref<8x4xf32, #tpu.memory_space<vmem>>, vector<8x1xf32>
      %cst_116 = arith.constant dense<0xFF800000> : vector<8xf32>
      %187 = vector.multi_reduction <maximumf>, %185, %cst_116 [1] : vector<8x8xf32> to vector<8xf32>
      %188 = vector.shape_cast %187 : vector<8xf32> to vector<8x1xf32>
      %189 = arith.maximumf %186, %188 : vector<8x1xf32>
      %190 = arith.subf %186, %189 : vector<8x1xf32>
      %191 = math.exp %190 : vector<8x1xf32>
      %192 = vector.broadcast %189 : vector<8x1xf32> to vector<8x8xf32>
      %193 = arith.subf %185, %192 : vector<8x8xf32>
      %194 = math.exp %193 : vector<8x8xf32>
      %c0_117 = arith.constant 0 : index
      %c0_118 = arith.constant 0 : index
      %195 = vector.load %arg11[%c0_117, %c0_118] : memref<8x4xf32, #tpu.memory_space<vmem>>, vector<8x1xf32>
      %196 = arith.mulf %191, %195 : vector<8x1xf32>
      %cst_119 = arith.constant dense<0.000000e+00> : vector<8xf32>
      %197 = vector.multi_reduction <add>, %194, %cst_119 [1] : vector<8x8xf32> to vector<8xf32>
      %198 = vector.shape_cast %197 : vector<8xf32> to vector<8x1xf32>
      %199 = arith.addf %196, %198 : vector<8x1xf32>
      %c0_120 = arith.constant 0 : index
      %c0_121 = arith.constant 0 : index
      %200 = vector.load %arg11[%c0_120, %c0_121] : memref<8x4xf32, #tpu.memory_space<vmem>>, vector<8x1xf32>
      tpu.vector_store %arg11[%c0_120, %c0_121], %199 {strides = array<i32>} : memref<8x4xf32, #tpu.memory_space<vmem>>, vector<8x1xf32>,
      %c0_122 = arith.constant 0 : index
      %c0_123 = arith.constant 0 : index
      %201 = vector.load %arg12[%c0_122, %c0_123] : memref<8x32xf32, #tpu.memory_space<vmem>>, vector<8x8xf32>
      %202 = vector.broadcast %191 : vector<8x1xf32> to vector<8x8xf32>
      %203 = arith.mulf %202, %201 : vector<8x8xf32>
      %204 = vector.extract_strided_slice %182 {offsets = [0, 0], sizes = [8, 8], strides = [1, 1]} : vector<8x32xf32> to vector<8x8xf32>
      %cst_124 = arith.constant dense<0.000000e+00> : vector<8x8xf32>
      %205 = tpu.matmul %194, %204, %cst_124 {dimension_numbers = #tpu.dot_dimension_numbers<[1], [0], [0], [1], [0, 0, 1, 1], [], []>} : vector<8x8xf32>, vector<8x8xf32>, vector<8x8xf32> -> vector<8x8xf32>
      %206 = arith.addf %203, %205 : vector<8x8xf32>
      %c0_125 = arith.constant 0 : index
      %c0_126 = arith.constant 0 : index
      %207 = vector.load %arg12[%c0_125, %c0_126] : memref<8x32xf32, #tpu.memory_space<vmem>>, vector<8x8xf32>
      tpu.vector_store %arg12[%c0_125, %c0_126], %206 {strides = array<i32>} : memref<8x32xf32, #tpu.memory_space<vmem>>, vector<8x8xf32>,
      %c0_127 = arith.constant 0 : index
      %c0_128 = arith.constant 0 : index
      %208 = vector.load %arg10[%c0_127, %c0_128] : memref<8x4xf32, #tpu.memory_space<vmem>>, vector<8x1xf32>
      tpu.vector_store %arg10[%c0_127, %c0_128], %189 {strides = array<i32>} : memref<8x4xf32, #tpu.memory_space<vmem>>, vector<8x1xf32>,
      %209 = vector.extract_strided_slice %11 {offsets = [0, 8], sizes = [8, 8], strides = [1, 1]} : vector<8x32xf32> to vector<8x8xf32>
      %210 = vector.extract_strided_slice %180 {offsets = [0, 8], sizes = [8, 8], strides = [1, 1]} : vector<8x32xf32> to vector<8x8xf32>
      %cst_129 = arith.constant dense<0.000000e+00> : vector<8x8xf32>
      %211 = tpu.matmul %209, %210, %cst_129 {dimension_numbers = #tpu.dot_dimension_numbers<[1], [1], [0], [0], [0, 0, 1, 0], [], []>} : vector<8x8xf32>, vector<8x8xf32>, vector<8x8xf32> -> vector<8x8xf32>
      %c0_130 = arith.constant 0 : index
      %c1_131 = arith.constant 1 : index
      %212 = vector.load %arg10[%c0_130, %c1_131] : memref<8x4xf32, #tpu.memory_space<vmem>>, vector<8x1xf32>
      %cst_132 = arith.constant dense<0xFF800000> : vector<8xf32>
      %213 = vector.multi_reduction <maximumf>, %211, %cst_132 [1] : vector<8x8xf32> to vector<8xf32>
      %214 = vector.shape_cast %213 : vector<8xf32> to vector<8x1xf32>
      %215 = arith.maximumf %212, %214 : vector<8x1xf32>
      %216 = arith.subf %212, %215 : vector<8x1xf32>
      %217 = math.exp %216 : vector<8x1xf32>
      %218 = vector.broadcast %215 : vector<8x1xf32> to vector<8x8xf32>
      %219 = arith.subf %211, %218 : vector<8x8xf32>
      %220 = math.exp %219 : vector<8x8xf32>
      %c0_133 = arith.constant 0 : index
      %c1_134 = arith.constant 1 : index
      %221 = vector.load %arg11[%c0_133, %c1_134] : memref<8x4xf32, #tpu.memory_space<vmem>>, vector<8x1xf32>
      %222 = arith.mulf %217, %221 : vector<8x1xf32>
      %cst_135 = arith.constant dense<0.000000e+00> : vector<8xf32>
      %223 = vector.multi_reduction <add>, %220, %cst_135 [1] : vector<8x8xf32> to vector<8xf32>
      %224 = vector.shape_cast %223 : vector<8xf32> to vector<8x1xf32>
      %225 = arith.addf %222, %224 : vector<8x1xf32>
      %c0_136 = arith.constant 0 : index
      %c1_137 = arith.constant 1 : index
      %226 = vector.load %arg11[%c0_136, %c1_137] : memref<8x4xf32, #tpu.memory_space<vmem>>, vector<8x1xf32>
      tpu.vector_store %arg11[%c0_136, %c1_137], %225 {strides = array<i32>} : memref<8x4xf32, #tpu.memory_space<vmem>>, vector<8x1xf32>,
      %c0_138 = arith.constant 0 : index
      %c8_139 = arith.constant 8 : index
      %227 = vector.load %arg12[%c0_138, %c8_139] : memref<8x32xf32, #tpu.memory_space<vmem>>, vector<8x8xf32>
      %228 = vector.broadcast %217 : vector<8x1xf32> to vector<8x8xf32>
      %229 = arith.mulf %228, %227 : vector<8x8xf32>
      %230 = vector.extract_strided_slice %182 {offsets = [0, 8], sizes = [8, 8], strides = [1, 1]} : vector<8x32xf32> to vector<8x8xf32>
      %cst_140 = arith.constant dense<0.000000e+00> : vector<8x8xf32>
      %231 = tpu.matmul %220, %230, %cst_140 {dimension_numbers = #tpu.dot_dimension_numbers<[1], [0], [0], [1], [0, 0, 1, 1], [], []>} : vector<8x8xf32>, vector<8x8xf32>, vector<8x8xf32> -> vector<8x8xf32>
      %232 = arith.addf %229, %231 : vector<8x8xf32>
      %c0_141 = arith.constant 0 : index
      %c8_142 = arith.constant 8 : index
      %233 = vector.load %arg12[%c0_141, %c8_142] : memref<8x32xf32, #tpu.memory_space<vmem>>, vector<8x8xf32>
      tpu.vector_store %arg12[%c0_141, %c8_142], %232 {strides = array<i32>} : memref<8x32xf32, #tpu.memory_space<vmem>>, vector<8x8xf32>,
      %c0_143 = arith.constant 0 : index
      %c1_144 = arith.constant 1 : index
      %234 = vector.load %arg10[%c0_143, %c1_144] : memref<8x4xf32, #tpu.memory_space<vmem>>, vector<8x1xf32>
      tpu.vector_store %arg10[%c0_143, %c1_144], %215 {strides = array<i32>} : memref<8x4xf32, #tpu.memory_space<vmem>>, vector<8x1xf32>,
      %235 = vector.extract_strided_slice %11 {offsets = [0, 16], sizes = [8, 8], strides = [1, 1]} : vector<8x32xf32> to vector<8x8xf32>
      %236 = vector.extract_strided_slice %180 {offsets = [0, 16], sizes = [8, 8], strides = [1, 1]} : vector<8x32xf32> to vector<8x8xf32>
      %cst_145 = arith.constant dense<0.000000e+00> : vector<8x8xf32>
      %237 = tpu.matmul %235, %236, %cst_145 {dimension_numbers = #tpu.dot_dimension_numbers<[1], [1], [0], [0], [0, 0, 1, 0], [], []>} : vector<8x8xf32>, vector<8x8xf32>, vector<8x8xf32> -> vector<8x8xf32>
      %c0_146 = arith.constant 0 : index
      %c2_147 = arith.constant 2 : index
      %238 = vector.load %arg10[%c0_146, %c2_147] : memref<8x4xf32, #tpu.memory_space<vmem>>, vector<8x1xf32>
      %cst_148 = arith.constant dense<0xFF800000> : vector<8xf32>
      %239 = vector.multi_reduction <maximumf>, %237, %cst_148 [1] : vector<8x8xf32> to vector<8xf32>
      %240 = vector.shape_cast %239 : vector<8xf32> to vector<8x1xf32>
      %241 = arith.maximumf %238, %240 : vector<8x1xf32>
      %242 = arith.subf %238, %241 : vector<8x1xf32>
      %243 = math.exp %242 : vector<8x1xf32>
      %244 = vector.broadcast %241 : vector<8x1xf32> to vector<8x8xf32>
      %245 = arith.subf %237, %244 : vector<8x8xf32>
      %246 = math.exp %245 : vector<8x8xf32>
      %c0_149 = arith.constant 0 : index
      %c2_150 = arith.constant 2 : index
      %247 = vector.load %arg11[%c0_149, %c2_150] : memref<8x4xf32, #tpu.memory_space<vmem>>, vector<8x1xf32>
      %248 = arith.mulf %243, %247 : vector<8x1xf32>
      %cst_151 = arith.constant dense<0.000000e+00> : vector<8xf32>
      %249 = vector.multi_reduction <add>, %246, %cst_151 [1] : vector<8x8xf32> to vector<8xf32>
      %250 = vector.shape_cast %249 : vector<8xf32> to vector<8x1xf32>
      %251 = arith.addf %248, %250 : vector<8x1xf32>
      %c0_152 = arith.constant 0 : index
      %c2_153 = arith.constant 2 : index
      %252 = vector.load %arg11[%c0_152, %c2_153] : memref<8x4xf32, #tpu.memory_space<vmem>>, vector<8x1xf32>
      tpu.vector_store %arg11[%c0_152, %c2_153], %251 {strides = array<i32>} : memref<8x4xf32, #tpu.memory_space<vmem>>, vector<8x1xf32>,
      %c0_154 = arith.constant 0 : index
      %c16_155 = arith.constant 16 : index
      %253 = vector.load %arg12[%c0_154, %c16_155] : memref<8x32xf32, #tpu.memory_space<vmem>>, vector<8x8xf32>
      %254 = vector.broadcast %243 : vector<8x1xf32> to vector<8x8xf32>
      %255 = arith.mulf %254, %253 : vector<8x8xf32>
      %256 = vector.extract_strided_slice %182 {offsets = [0, 16], sizes = [8, 8], strides = [1, 1]} : vector<8x32xf32> to vector<8x8xf32>
      %cst_156 = arith.constant dense<0.000000e+00> : vector<8x8xf32>
      %257 = tpu.matmul %246, %256, %cst_156 {dimension_numbers = #tpu.dot_dimension_numbers<[1], [0], [0], [1], [0, 0, 1, 1], [], []>} : vector<8x8xf32>, vector<8x8xf32>, vector<8x8xf32> -> vector<8x8xf32>
      %258 = arith.addf %255, %257 : vector<8x8xf32>
      %c0_157 = arith.constant 0 : index
      %c16_158 = arith.constant 16 : index
      %259 = vector.load %arg12[%c0_157, %c16_158] : memref<8x32xf32, #tpu.memory_space<vmem>>, vector<8x8xf32>
      tpu.vector_store %arg12[%c0_157, %c16_158], %258 {strides = array<i32>} : memref<8x32xf32, #tpu.memory_space<vmem>>, vector<8x8xf32>,
      %c0_159 = arith.constant 0 : index
      %c2_160 = arith.constant 2 : index
      %260 = vector.load %arg10[%c0_159, %c2_160] : memref<8x4xf32, #tpu.memory_space<vmem>>, vector<8x1xf32>
      tpu.vector_store %arg10[%c0_159, %c2_160], %241 {strides = array<i32>} : memref<8x4xf32, #tpu.memory_space<vmem>>, vector<8x1xf32>,
      %261 = vector.extract_strided_slice %11 {offsets = [0, 24], sizes = [8, 8], strides = [1, 1]} : vector<8x32xf32> to vector<8x8xf32>
      %262 = vector.extract_strided_slice %180 {offsets = [0, 24], sizes = [8, 8], strides = [1, 1]} : vector<8x32xf32> to vector<8x8xf32>
      %cst_161 = arith.constant dense<0.000000e+00> : vector<8x8xf32>
      %263 = tpu.matmul %261, %262, %cst_161 {dimension_numbers = #tpu.dot_dimension_numbers<[1], [1], [0], [0], [0, 0, 1, 0], [], []>} : vector<8x8xf32>, vector<8x8xf32>, vector<8x8xf32> -> vector<8x8xf32>
      %c0_162 = arith.constant 0 : index
      %c3_163 = arith.constant 3 : index
      %264 = vector.load %arg10[%c0_162, %c3_163] : memref<8x4xf32, #tpu.memory_space<vmem>>, vector<8x1xf32>
      %cst_164 = arith.constant dense<0xFF800000> : vector<8xf32>
      %265 = vector.multi_reduction <maximumf>, %263, %cst_164 [1] : vector<8x8xf32> to vector<8xf32>
      %266 = vector.shape_cast %265 : vector<8xf32> to vector<8x1xf32>
      %267 = arith.maximumf %264, %266 : vector<8x1xf32>
      %268 = arith.subf %264, %267 : vector<8x1xf32>
      %269 = math.exp %268 : vector<8x1xf32>
      %270 = vector.broadcast %267 : vector<8x1xf32> to vector<8x8xf32>
      %271 = arith.subf %263, %270 : vector<8x8xf32>
      %272 = math.exp %271 : vector<8x8xf32>
      %c0_165 = arith.constant 0 : index
      %c3_166 = arith.constant 3 : index
      %273 = vector.load %arg11[%c0_165, %c3_166] : memref<8x4xf32, #tpu.memory_space<vmem>>, vector<8x1xf32>
      %274 = arith.mulf %269, %273 : vector<8x1xf32>
      %cst_167 = arith.constant dense<0.000000e+00> : vector<8xf32>
      %275 = vector.multi_reduction <add>, %272, %cst_167 [1] : vector<8x8xf32> to vector<8xf32>
      %276 = vector.shape_cast %275 : vector<8xf32> to vector<8x1xf32>
      %277 = arith.addf %274, %276 : vector<8x1xf32>
      %c0_168 = arith.constant 0 : index
      %c3_169 = arith.constant 3 : index
      %278 = vector.load %arg11[%c0_168, %c3_169] : memref<8x4xf32, #tpu.memory_space<vmem>>, vector<8x1xf32>
      tpu.vector_store %arg11[%c0_168, %c3_169], %277 {strides = array<i32>} : memref<8x4xf32, #tpu.memory_space<vmem>>, vector<8x1xf32>,
      %c0_170 = arith.constant 0 : index
      %c24_171 = arith.constant 24 : index
      %279 = vector.load %arg12[%c0_170, %c24_171] : memref<8x32xf32, #tpu.memory_space<vmem>>, vector<8x8xf32>
      %280 = vector.broadcast %269 : vector<8x1xf32> to vector<8x8xf32>
      %281 = arith.mulf %280, %279 : vector<8x8xf32>
      %282 = vector.extract_strided_slice %182 {offsets = [0, 24], sizes = [8, 8], strides = [1, 1]} : vector<8x32xf32> to vector<8x8xf32>
      %cst_172 = arith.constant dense<0.000000e+00> : vector<8x8xf32>
      %283 = tpu.matmul %272, %282, %cst_172 {dimension_numbers = #tpu.dot_dimension_numbers<[1], [0], [0], [1], [0, 0, 1, 1], [], []>} : vector<8x8xf32>, vector<8x8xf32>, vector<8x8xf32> -> vector<8x8xf32>
      %284 = arith.addf %281, %283 : vector<8x8xf32>
      %c0_173 = arith.constant 0 : index
      %c24_174 = arith.constant 24 : index
      %285 = vector.load %arg12[%c0_173, %c24_174] : memref<8x32xf32, #tpu.memory_space<vmem>>, vector<8x8xf32>
      tpu.vector_store %arg12[%c0_173, %c24_174], %284 {strides = array<i32>} : memref<8x32xf32, #tpu.memory_space<vmem>>, vector<8x8xf32>,
      %c0_175 = arith.constant 0 : index
      %c3_176 = arith.constant 3 : index
      %286 = vector.load %arg10[%c0_175, %c3_176] : memref<8x4xf32, #tpu.memory_space<vmem>>, vector<8x1xf32>
      tpu.vector_store %arg10[%c0_175, %c3_176], %267 {strides = array<i32>} : memref<8x4xf32, #tpu.memory_space<vmem>>, vector<8x1xf32>,
    }
    %c8_i32_16 = arith.constant 8 : i32
    %20 = arith.muli %arg1, %c8_i32_16 : i32
    %21 = tpu.assume_multiple %20, 8 : i32
    %22 = arith.index_cast %21 : i32 to index
    %c0_17 = arith.constant 0 : index
    %23 = vector.load %arg8[%22, %c0_17] : memref<16x32xf32, #tpu.memory_space<vmem>>, vector<8x32xf32>
    %24 = arith.index_cast %21 : i32 to index
    %c0_18 = arith.constant 0 : index
    %25 = vector.load %arg9[%24, %c0_18] : memref<16x32xf32, #tpu.memory_space<vmem>>, vector<8x32xf32>
    %c8_i32_19 = arith.constant 8 : i32
    %26 = arith.muli %arg1, %c8_i32_19 : i32
    %27 = tpu.iota {dimensions = array<i32: 0>} : vector<8x8xi32>
    %28 = vector.broadcast %26 : i32 to vector<8x8xi32>
    %29 = arith.addi %28, %27 : vector<8x8xi32>
    %30 = tpu.iota {dimensions = array<i32: 1>} : vector<8x8xi32>
    %31 = vector.broadcast %21 : i32 to vector<8x8xi32>
    %32 = arith.addi %31, %30 : vector<8x8xi32>
    %33 = arith.cmpi sle, %32, %29 : vector<8x8xi32>
    %34 = vector.extract_strided_slice %11 {offsets = [0, 0], sizes = [8, 8], strides = [1, 1]} : vector<8x32xf32> to vector<8x8xf32>
    %35 = vector.extract_strided_slice %23 {offsets = [0, 0], sizes = [8, 8], strides = [1, 1]} : vector<8x32xf32> to vector<8x8xf32>
    %cst_20 = arith.constant dense<0.000000e+00> : vector<8x8xf32>
    %36 = tpu.matmul %34, %35, %cst_20 {dimension_numbers = #tpu.dot_dimension_numbers<[1], [1], [0], [0], [0, 0, 1, 0], [], []>} : vector<8x8xf32>, vector<8x8xf32>, vector<8x8xf32> -> vector<8x8xf32>
    %cst_21 = arith.constant 0xFF800000 : f32
    %37 = vector.broadcast %cst_21 : f32 to vector<8x8xf32>
    %38 = arith.select %33, %36, %37 : vector<8x8xi1>, vector<8x8xf32>
    %c0_22 = arith.constant 0 : index
    %c0_23 = arith.constant 0 : index
    %39 = vector.load %arg10[%c0_22, %c0_23] : memref<8x4xf32, #tpu.memory_space<vmem>>, vector<8x1xf32>
    %cst_24 = arith.constant dense<0xFF800000> : vector<8xf32>
    %40 = vector.multi_reduction <maximumf>, %38, %cst_24 [1] : vector<8x8xf32> to vector<8xf32>
    %41 = vector.shape_cast %40 : vector<8xf32> to vector<8x1xf32>
    %42 = arith.maximumf %39, %41 : vector<8x1xf32>
    %43 = arith.subf %39, %42 : vector<8x1xf32>
    %44 = math.exp %43 : vector<8x1xf32>
    %45 = vector.broadcast %42 : vector<8x1xf32> to vector<8x8xf32>
    %46 = arith.subf %38, %45 : vector<8x8xf32>
    %47 = math.exp %46 : vector<8x8xf32>
    %c0_25 = arith.constant 0 : index
    %c0_26 = arith.constant 0 : index
    %48 = vector.load %arg11[%c0_25, %c0_26] : memref<8x4xf32, #tpu.memory_space<vmem>>, vector<8x1xf32>
    %49 = arith.mulf %44, %48 : vector<8x1xf32>
    %cst_27 = arith.constant dense<0.000000e+00> : vector<8xf32>
    %50 = vector.multi_reduction <add>, %47, %cst_27 [1] : vector<8x8xf32> to vector<8xf32>
    %51 = vector.shape_cast %50 : vector<8xf32> to vector<8x1xf32>
    %52 = arith.addf %49, %51 : vector<8x1xf32>
    %c0_28 = arith.constant 0 : index
    %c0_29 = arith.constant 0 : index
    %53 = vector.load %arg11[%c0_28, %c0_29] : memref<8x4xf32, #tpu.memory_space<vmem>>, vector<8x1xf32>
    tpu.vector_store %arg11[%c0_28, %c0_29], %52 {strides = array<i32>} : memref<8x4xf32, #tpu.memory_space<vmem>>, vector<8x1xf32>,
    %c0_30 = arith.constant 0 : index
    %c0_31 = arith.constant 0 : index
    %54 = vector.load %arg12[%c0_30, %c0_31] : memref<8x32xf32, #tpu.memory_space<vmem>>, vector<8x8xf32>
    %55 = vector.broadcast %44 : vector<8x1xf32> to vector<8x8xf32>
    %56 = arith.mulf %55, %54 : vector<8x8xf32>
    %57 = vector.extract_strided_slice %25 {offsets = [0, 0], sizes = [8, 8], strides = [1, 1]} : vector<8x32xf32> to vector<8x8xf32>
    %cst_32 = arith.constant dense<0.000000e+00> : vector<8x8xf32>
    %58 = tpu.matmul %47, %57, %cst_32 {dimension_numbers = #tpu.dot_dimension_numbers<[1], [0], [0], [1], [0, 0, 1, 1], [], []>} : vector<8x8xf32>, vector<8x8xf32>, vector<8x8xf32> -> vector<8x8xf32>
    %59 = arith.addf %56, %58 : vector<8x8xf32>
    %c0_33 = arith.constant 0 : index
    %c0_34 = arith.constant 0 : index
    %60 = vector.load %arg12[%c0_33, %c0_34] : memref<8x32xf32, #tpu.memory_space<vmem>>, vector<8x8xf32>
    tpu.vector_store %arg12[%c0_33, %c0_34], %59 {strides = array<i32>} : memref<8x32xf32, #tpu.memory_space<vmem>>, vector<8x8xf32>,
    %c0_35 = arith.constant 0 : index
    %c0_36 = arith.constant 0 : index
    %61 = vector.load %arg10[%c0_35, %c0_36] : memref<8x4xf32, #tpu.memory_space<vmem>>, vector<8x1xf32>
    tpu.vector_store %arg10[%c0_35, %c0_36], %42 {strides = array<i32>} : memref<8x4xf32, #tpu.memory_space<vmem>>, vector<8x1xf32>,
    %62 = vector.extract_strided_slice %11 {offsets = [0, 8], sizes = [8, 8], strides = [1, 1]} : vector<8x32xf32> to vector<8x8xf32>
    %63 = vector.extract_strided_slice %23 {offsets = [0, 8], sizes = [8, 8], strides = [1, 1]} : vector<8x32xf32> to vector<8x8xf32>
    %cst_37 = arith.constant dense<0.000000e+00> : vector<8x8xf32>
    %64 = tpu.matmul %62, %63, %cst_37 {dimension_numbers = #tpu.dot_dimension_numbers<[1], [1], [0], [0], [0, 0, 1, 0], [], []>} : vector<8x8xf32>, vector<8x8xf32>, vector<8x8xf32> -> vector<8x8xf32>
    %cst_38 = arith.constant 0xFF800000 : f32
    %65 = vector.broadcast %cst_38 : f32 to vector<8x8xf32>
    %66 = arith.select %33, %64, %65 : vector<8x8xi1>, vector<8x8xf32>
    %c0_39 = arith.constant 0 : index
    %c1 = arith.constant 1 : index
    %67 = vector.load %arg10[%c0_39, %c1] : memref<8x4xf32, #tpu.memory_space<vmem>>, vector<8x1xf32>
    %cst_40 = arith.constant dense<0xFF800000> : vector<8xf32>
    %68 = vector.multi_reduction <maximumf>, %66, %cst_40 [1] : vector<8x8xf32> to vector<8xf32>
    %69 = vector.shape_cast %68 : vector<8xf32> to vector<8x1xf32>
    %70 = arith.maximumf %67, %69 : vector<8x1xf32>
    %71 = arith.subf %67, %70 : vector<8x1xf32>
    %72 = math.exp %71 : vector<8x1xf32>
    %73 = vector.broadcast %70 : vector<8x1xf32> to vector<8x8xf32>
    %74 = arith.subf %66, %73 : vector<8x8xf32>
    %75 = math.exp %74 : vector<8x8xf32>
    %c0_41 = arith.constant 0 : index
    %c1_42 = arith.constant 1 : index
    %76 = vector.load %arg11[%c0_41, %c1_42] : memref<8x4xf32, #tpu.memory_space<vmem>>, vector<8x1xf32>
    %77 = arith.mulf %72, %76 : vector<8x1xf32>
    %cst_43 = arith.constant dense<0.000000e+00> : vector<8xf32>
    %78 = vector.multi_reduction <add>, %75, %cst_43 [1] : vector<8x8xf32> to vector<8xf32>
    %79 = vector.shape_cast %78 : vector<8xf32> to vector<8x1xf32>
    %80 = arith.addf %77, %79 : vector<8x1xf32>
    %c0_44 = arith.constant 0 : index
    %c1_45 = arith.constant 1 : index
    %81 = vector.load %arg11[%c0_44, %c1_45] : memref<8x4xf32, #tpu.memory_space<vmem>>, vector<8x1xf32>
    tpu.vector_store %arg11[%c0_44, %c1_45], %80 {strides = array<i32>} : memref<8x4xf32, #tpu.memory_space<vmem>>, vector<8x1xf32>,
    %c0_46 = arith.constant 0 : index
    %c8 = arith.constant 8 : index
    %82 = vector.load %arg12[%c0_46, %c8] : memref<8x32xf32, #tpu.memory_space<vmem>>, vector<8x8xf32>
    %83 = vector.broadcast %72 : vector<8x1xf32> to vector<8x8xf32>
    %84 = arith.mulf %83, %82 : vector<8x8xf32>
    %85 = vector.extract_strided_slice %25 {offsets = [0, 8], sizes = [8, 8], strides = [1, 1]} : vector<8x32xf32> to vector<8x8xf32>
    %cst_47 = arith.constant dense<0.000000e+00> : vector<8x8xf32>
    %86 = tpu.matmul %75, %85, %cst_47 {dimension_numbers = #tpu.dot_dimension_numbers<[1], [0], [0], [1], [0, 0, 1, 1], [], []>} : vector<8x8xf32>, vector<8x8xf32>, vector<8x8xf32> -> vector<8x8xf32>
    %87 = arith.addf %84, %86 : vector<8x8xf32>
    %c0_48 = arith.constant 0 : index
    %c8_49 = arith.constant 8 : index
    %88 = vector.load %arg12[%c0_48, %c8_49] : memref<8x32xf32, #tpu.memory_space<vmem>>, vector<8x8xf32>
    tpu.vector_store %arg12[%c0_48, %c8_49], %87 {strides = array<i32>} : memref<8x32xf32, #tpu.memory_space<vmem>>, vector<8x8xf32>,
    %c0_50 = arith.constant 0 : index
    %c1_51 = arith.constant 1 : index
    %89 = vector.load %arg10[%c0_50, %c1_51] : memref<8x4xf32, #tpu.memory_space<vmem>>, vector<8x1xf32>
    tpu.vector_store %arg10[%c0_50, %c1_51], %70 {strides = array<i32>} : memref<8x4xf32, #tpu.memory_space<vmem>>, vector<8x1xf32>,
    %90 = vector.extract_strided_slice %11 {offsets = [0, 16], sizes = [8, 8], strides = [1, 1]} : vector<8x32xf32> to vector<8x8xf32>
    %91 = vector.extract_strided_slice %23 {offsets = [0, 16], sizes = [8, 8], strides = [1, 1]} : vector<8x32xf32> to vector<8x8xf32>
    %cst_52 = arith.constant dense<0.000000e+00> : vector<8x8xf32>
    %92 = tpu.matmul %90, %91, %cst_52 {dimension_numbers = #tpu.dot_dimension_numbers<[1], [1], [0], [0], [0, 0, 1, 0], [], []>} : vector<8x8xf32>, vector<8x8xf32>, vector<8x8xf32> -> vector<8x8xf32>
    %cst_53 = arith.constant 0xFF800000 : f32
    %93 = vector.broadcast %cst_53 : f32 to vector<8x8xf32>
    %94 = arith.select %33, %92, %93 : vector<8x8xi1>, vector<8x8xf32>
    %c0_54 = arith.constant 0 : index
    %c2 = arith.constant 2 : index
    %95 = vector.load %arg10[%c0_54, %c2] : memref<8x4xf32, #tpu.memory_space<vmem>>, vector<8x1xf32>
    %cst_55 = arith.constant dense<0xFF800000> : vector<8xf32>
    %96 = vector.multi_reduction <maximumf>, %94, %cst_55 [1] : vector<8x8xf32> to vector<8xf32>
    %97 = vector.shape_cast %96 : vector<8xf32> to vector<8x1xf32>
    %98 = arith.maximumf %95, %97 : vector<8x1xf32>
    %99 = arith.subf %95, %98 : vector<8x1xf32>
    %100 = math.exp %99 : vector<8x1xf32>
    %101 = vector.broadcast %98 : vector<8x1xf32> to vector<8x8xf32>
    %102 = arith.subf %94, %101 : vector<8x8xf32>
    %103 = math.exp %102 : vector<8x8xf32>
    %c0_56 = arith.constant 0 : index
    %c2_57 = arith.constant 2 : index
    %104 = vector.load %arg11[%c0_56, %c2_57] : memref<8x4xf32, #tpu.memory_space<vmem>>, vector<8x1xf32>
    %105 = arith.mulf %100, %104 : vector<8x1xf32>
    %cst_58 = arith.constant dense<0.000000e+00> : vector<8xf32>
    %106 = vector.multi_reduction <add>, %103, %cst_58 [1] : vector<8x8xf32> to vector<8xf32>
    %107 = vector.shape_cast %106 : vector<8xf32> to vector<8x1xf32>
    %108 = arith.addf %105, %107 : vector<8x1xf32>
    %c0_59 = arith.constant 0 : index
    %c2_60 = arith.constant 2 : index
    %109 = vector.load %arg11[%c0_59, %c2_60] : memref<8x4xf32, #tpu.memory_space<vmem>>, vector<8x1xf32>
    tpu.vector_store %arg11[%c0_59, %c2_60], %108 {strides = array<i32>} : memref<8x4xf32, #tpu.memory_space<vmem>>, vector<8x1xf32>,
    %c0_61 = arith.constant 0 : index
    %c16 = arith.constant 16 : index
    %110 = vector.load %arg12[%c0_61, %c16] : memref<8x32xf32, #tpu.memory_space<vmem>>, vector<8x8xf32>
    %111 = vector.broadcast %100 : vector<8x1xf32> to vector<8x8xf32>
    %112 = arith.mulf %111, %110 : vector<8x8xf32>
    %113 = vector.extract_strided_slice %25 {offsets = [0, 16], sizes = [8, 8], strides = [1, 1]} : vector<8x32xf32> to vector<8x8xf32>
    %cst_62 = arith.constant dense<0.000000e+00> : vector<8x8xf32>
    %114 = tpu.matmul %103, %113, %cst_62 {dimension_numbers = #tpu.dot_dimension_numbers<[1], [0], [0], [1], [0, 0, 1, 1], [], []>} : vector<8x8xf32>, vector<8x8xf32>, vector<8x8xf32> -> vector<8x8xf32>
    %115 = arith.addf %112, %114 : vector<8x8xf32>
    %c0_63 = arith.constant 0 : index
    %c16_64 = arith.constant 16 : index
    %116 = vector.load %arg12[%c0_63, %c16_64] : memref<8x32xf32, #tpu.memory_space<vmem>>, vector<8x8xf32>
    tpu.vector_store %arg12[%c0_63, %c16_64], %115 {strides = array<i32>} : memref<8x32xf32, #tpu.memory_space<vmem>>, vector<8x8xf32>,
    %c0_65 = arith.constant 0 : index
    %c2_66 = arith.constant 2 : index
    %117 = vector.load %arg10[%c0_65, %c2_66] : memref<8x4xf32, #tpu.memory_space<vmem>>, vector<8x1xf32>
    tpu.vector_store %arg10[%c0_65, %c2_66], %98 {strides = array<i32>} : memref<8x4xf32, #tpu.memory_space<vmem>>, vector<8x1xf32>,
    %118 = vector.extract_strided_slice %11 {offsets = [0, 24], sizes = [8, 8], strides = [1, 1]} : vector<8x32xf32> to vector<8x8xf32>
    %119 = vector.extract_strided_slice %23 {offsets = [0, 24], sizes = [8, 8], strides = [1, 1]} : vector<8x32xf32> to vector<8x8xf32>
    %cst_67 = arith.constant dense<0.000000e+00> : vector<8x8xf32>
    %120 = tpu.matmul %118, %119, %cst_67 {dimension_numbers = #tpu.dot_dimension_numbers<[1], [1], [0], [0], [0, 0, 1, 0], [], []>} : vector<8x8xf32>, vector<8x8xf32>, vector<8x8xf32> -> vector<8x8xf32>
    %cst_68 = arith.constant 0xFF800000 : f32
    %121 = vector.broadcast %cst_68 : f32 to vector<8x8xf32>
    %122 = arith.select %33, %120, %121 : vector<8x8xi1>, vector<8x8xf32>
    %c0_69 = arith.constant 0 : index
    %c3 = arith.constant 3 : index
    %123 = vector.load %arg10[%c0_69, %c3] : memref<8x4xf32, #tpu.memory_space<vmem>>, vector<8x1xf32>
    %cst_70 = arith.constant dense<0xFF800000> : vector<8xf32>
    %124 = vector.multi_reduction <maximumf>, %122, %cst_70 [1] : vector<8x8xf32> to vector<8xf32>
    %125 = vector.shape_cast %124 : vector<8xf32> to vector<8x1xf32>
    %126 = arith.maximumf %123, %125 : vector<8x1xf32>
    %127 = arith.subf %123, %126 : vector<8x1xf32>
    %128 = math.exp %127 : vector<8x1xf32>
    %129 = vector.broadcast %126 : vector<8x1xf32> to vector<8x8xf32>
    %130 = arith.subf %122, %129 : vector<8x8xf32>
    %131 = math.exp %130 : vector<8x8xf32>
    %c0_71 = arith.constant 0 : index
    %c3_72 = arith.constant 3 : index
    %132 = vector.load %arg11[%c0_71, %c3_72] : memref<8x4xf32, #tpu.memory_space<vmem>>, vector<8x1xf32>
    %133 = arith.mulf %128, %132 : vector<8x1xf32>
    %cst_73 = arith.constant dense<0.000000e+00> : vector<8xf32>
    %134 = vector.multi_reduction <add>, %131, %cst_73 [1] : vector<8x8xf32> to vector<8xf32>
    %135 = vector.shape_cast %134 : vector<8xf32> to vector<8x1xf32>
    %136 = arith.addf %133, %135 : vector<8x1xf32>
    %c0_74 = arith.constant 0 : index
    %c3_75 = arith.constant 3 : index
    %137 = vector.load %arg11[%c0_74, %c3_75] : memref<8x4xf32, #tpu.memory_space<vmem>>, vector<8x1xf32>
    tpu.vector_store %arg11[%c0_74, %c3_75], %136 {strides = array<i32>} : memref<8x4xf32, #tpu.memory_space<vmem>>, vector<8x1xf32>,
    %c0_76 = arith.constant 0 : index
    %c24 = arith.constant 24 : index
    %138 = vector.load %arg12[%c0_76, %c24] : memref<8x32xf32, #tpu.memory_space<vmem>>, vector<8x8xf32>
    %139 = vector.broadcast %128 : vector<8x1xf32> to vector<8x8xf32>
    %140 = arith.mulf %139, %138 : vector<8x8xf32>
    %141 = vector.extract_strided_slice %25 {offsets = [0, 24], sizes = [8, 8], strides = [1, 1]} : vector<8x32xf32> to vector<8x8xf32>
    %cst_77 = arith.constant dense<0.000000e+00> : vector<8x8xf32>
    %142 = tpu.matmul %131, %141, %cst_77 {dimension_numbers = #tpu.dot_dimension_numbers<[1], [0], [0], [1], [0, 0, 1, 1], [], []>} : vector<8x8xf32>, vector<8x8xf32>, vector<8x8xf32> -> vector<8x8xf32>
    %143 = arith.addf %140, %142 : vector<8x8xf32>
    %c0_78 = arith.constant 0 : index
    %c24_79 = arith.constant 24 : index
    %144 = vector.load %arg12[%c0_78, %c24_79] : memref<8x32xf32, #tpu.memory_space<vmem>>, vector<8x8xf32>
    tpu.vector_store %arg12[%c0_78, %c24_79], %143 {strides = array<i32>} : memref<8x32xf32, #tpu.memory_space<vmem>>, vector<8x8xf32>,
    %c0_80 = arith.constant 0 : index
    %c3_81 = arith.constant 3 : index
    %145 = vector.load %arg10[%c0_80, %c3_81] : memref<8x4xf32, #tpu.memory_space<vmem>>, vector<8x1xf32>
    tpu.vector_store %arg10[%c0_80, %c3_81], %126 {strides = array<i32>} : memref<8x4xf32, #tpu.memory_space<vmem>>, vector<8x1xf32>,
    %c0_82 = arith.constant 0 : index
    %c0_83 = arith.constant 0 : index
    %146 = vector.load %arg11[%c0_82, %c0_83] : memref<8x4xf32, #tpu.memory_space<vmem>>, vector<8x4xf32>
    %147 = tpu.reciprocal %146 {approx = true} : vector<8x4xf32> -> vector<8x4xf32>
    %c0_84 = arith.constant 0 : index
    %c0_85 = arith.constant 0 : index
    %148 = vector.load %arg12[%c0_84, %c0_85] : memref<8x32xf32, #tpu.memory_space<vmem>>, vector<8x8xf32>
    %149 = vector.extract_strided_slice %147 {offsets = [0, 0], sizes = [8, 1], strides = [1, 1]} : vector<8x4xf32> to vector<8x1xf32>
    %150 = vector.broadcast %149 : vector<8x1xf32> to vector<8x8xf32>
    %151 = arith.mulf %148, %150 : vector<8x8xf32>
    %c0_86 = arith.constant 0 : index
    %c0_87 = arith.constant 0 : index
    %152 = vector.load %arg12[%c0_86, %c0_87] : memref<8x32xf32, #tpu.memory_space<vmem>>, vector<8x8xf32>
    tpu.vector_store %arg12[%c0_86, %c0_87], %151 {strides = array<i32>} : memref<8x32xf32, #tpu.memory_space<vmem>>, vector<8x8xf32>,
    %c0_88 = arith.constant 0 : index
    %c8_89 = arith.constant 8 : index
    %153 = vector.load %arg12[%c0_88, %c8_89] : memref<8x32xf32, #tpu.memory_space<vmem>>, vector<8x8xf32>
    %154 = vector.extract_strided_slice %147 {offsets = [0, 1], sizes = [8, 1], strides = [1, 1]} : vector<8x4xf32> to vector<8x1xf32>
    %155 = vector.broadcast %154 : vector<8x1xf32> to vector<8x8xf32>
    %156 = arith.mulf %153, %155 : vector<8x8xf32>
    %c0_90 = arith.constant 0 : index
    %c8_91 = arith.constant 8 : index
    %157 = vector.load %arg12[%c0_90, %c8_91] : memref<8x32xf32, #tpu.memory_space<vmem>>, vector<8x8xf32>
    tpu.vector_store %arg12[%c0_90, %c8_91], %156 {strides = array<i32>} : memref<8x32xf32, #tpu.memory_space<vmem>>, vector<8x8xf32>,
    %c0_92 = arith.constant 0 : index
    %c16_93 = arith.constant 16 : index
    %158 = vector.load %arg12[%c0_92, %c16_93] : memref<8x32xf32, #tpu.memory_space<vmem>>, vector<8x8xf32>
    %159 = vector.extract_strided_slice %147 {offsets = [0, 2], sizes = [8, 1], strides = [1, 1]} : vector<8x4xf32> to vector<8x1xf32>
    %160 = vector.broadcast %159 : vector<8x1xf32> to vector<8x8xf32>
    %161 = arith.mulf %158, %160 : vector<8x8xf32>
    %c0_94 = arith.constant 0 : index
    %c16_95 = arith.constant 16 : index
    %162 = vector.load %arg12[%c0_94, %c16_95] : memref<8x32xf32, #tpu.memory_space<vmem>>, vector<8x8xf32>
    tpu.vector_store %arg12[%c0_94, %c16_95], %161 {strides = array<i32>} : memref<8x32xf32, #tpu.memory_space<vmem>>, vector<8x8xf32>,
    %c0_96 = arith.constant 0 : index
    %c24_97 = arith.constant 24 : index
    %163 = vector.load %arg12[%c0_96, %c24_97] : memref<8x32xf32, #tpu.memory_space<vmem>>, vector<8x8xf32>
    %164 = vector.extract_strided_slice %147 {offsets = [0, 3], sizes = [8, 1], strides = [1, 1]} : vector<8x4xf32> to vector<8x1xf32>
    %165 = vector.broadcast %164 : vector<8x1xf32> to vector<8x8xf32>
    %166 = arith.mulf %163, %165 : vector<8x8xf32>
    %c0_98 = arith.constant 0 : index
    %c24_99 = arith.constant 24 : index
    %167 = vector.load %arg12[%c0_98, %c24_99] : memref<8x32xf32, #tpu.memory_space<vmem>>, vector<8x8xf32>
    tpu.vector_store %arg12[%c0_98, %c24_99], %166 {strides = array<i32>} : memref<8x32xf32, #tpu.memory_space<vmem>>, vector<8x8xf32>,
    %c0_100 = arith.constant 0 : index
    %c0_101 = arith.constant 0 : index
    %168 = vector.load %arg12[%c0_100, %c0_101] : memref<8x32xf32, #tpu.memory_space<vmem>>, vector<8x32xf32>
    %c0_102 = arith.constant 0 : index
    %c0_103 = arith.constant 0 : index
    %169 = vector.load %arg5[%c0_102, %c0_103] : memref<32x32xf32, #tpu.memory_space<vmem>>, vector<32x32xf32>
    %cst_104 = arith.constant dense<0.000000e+00> : vector<8x32xf32>
    %170 = tpu.matmul %168, %169, %cst_104 {dimension_numbers = #tpu.dot_dimension_numbers<[1], [0], [0], [1], [0, 0, 1, 1], [], []>} : vector<8x32xf32>, vector<32x32xf32>, vector<8x32xf32> -> vector<8x32xf32>
    %c0_105 = arith.constant 0 : index
    %c0_106 = arith.constant 0 : index
    %171 = vector.load %arg6[%c0_105, %c0_106] : memref<1x32xf32, #tpu.memory_space<vmem>>, vector<1x32xf32>
    %172 = vector.broadcast %171 : vector<1x32xf32> to vector<8x32xf32>
    %173 = arith.addf %170, %172 : vector<8x32xf32>
    %c0_107 = arith.constant 0 : index
    %c0_108 = arith.constant 0 : index
    %c0_109 = arith.constant 0 : index
    %174 = vector.load %arg7[%c0_107, %c0_108, %c0_109] : memref<1x8x32xf32, #tpu.memory_space<vmem>>, vector<1x8x32xf32>
    %175 = vector.shape_cast %174 : vector<1x8x32xf32> to vector<8x32xf32>
    %176 = vector.shape_cast %173 : vector<8x32xf32> to vector<1x8x32xf32>
    tpu.vector_store %arg7[%c0_107, %c0_108, %c0_109], %176 {strides = array<i32>} : memref<1x8x32xf32, #tpu.memory_space<vmem>>, vector<1x8x32xf32>,
    return
  }
  func.func @transform_0(%arg0: i32, %arg1: i32) -> (i32, i32, i32) {
    %c0_i32 = arith.constant 0 : i32
    %c0_i32_0 = arith.constant 0 : i32
    %c0_i32_1 = arith.constant 0 : i32
    return %arg0, %c0_i32, %c0_i32_0 : i32, i32, i32
  }
  func.func @transform_1(%arg0: i32, %arg1: i32) -> (i32, i32) {
    %c0_i32 = arith.constant 0 : i32
    %c0_i32_0 = arith.constant 0 : i32
    %c0_i32_1 = arith.constant 0 : i32
    return %c0_i32, %c0_i32_0 : i32, i32
  }
  func.func @transform_2(%arg0: i32, %arg1: i32) -> (i32, i32) {
    %c0_i32 = arith.constant 0 : i32
    %c0_i32_0 = arith.constant 0 : i32
    %c0_i32_1 = arith.constant 0 : i32
    return %c0_i32, %c0_i32_0 : i32, i32
  }
  func.func @transform_3(%arg0: i32, %arg1: i32) -> (i32, i32) {
    %c0_i32 = arith.constant 0 : i32
    %c0_i32_0 = arith.constant 0 : i32
    %c0_i32_1 = arith.constant 0 : i32
    return %c0_i32, %c0_i32_0 : i32, i32
  }
  func.func @transform_4(%arg0: i32, %arg1: i32) -> (i32, i32) {
    %c0_i32 = arith.constant 0 : i32
    %c0_i32_0 = arith.constant 0 : i32
    %c0_i32_1 = arith.constant 0 : i32
    return %c0_i32, %c0_i32_0 : i32, i32
  }
  func.func @transform_5(%arg0: i32, %arg1: i32) -> (i32, i32, i32) {
    %c0_i32 = arith.constant 0 : i32
    %c0_i32_0 = arith.constant 0 : i32
    return %arg0, %arg1, %c0_i32 : i32, i32, i32
  }
}

</mosaic_0001>

<llo_original>
// kernel: tpu_custom_call.1
$region0: #{tpu_custom_call.1}
  #allocation0 [shape = 'u32[]', space=smem, size = 0x4, offset = 0x4, fixed_abs, tag = 'smem constant byte address 0x4 - core index']
  #allocation1 [shape = 'u32[144,128]{1,0:T(1,128)}', space=vmem, size = 0x12000, scoped, tag = 'internal scratch']
  #allocation2 [shape = 'f32[16,32]{1,0:T(8,128)}', space=vmem, size = 0x2000, scoped, tag = 'scratch operand']
  #allocation3 [shape = 'f32[16,32]{1,0:T(8,128)}', space=vmem, size = 0x2000, scoped, tag = 'scratch operand']
  #allocation4 [shape = 'f32[8,4]{1,0:T(8,128)}', space=vmem, size = 0x1000, scoped, tag = 'scratch operand']
  #allocation5 [shape = 'f32[8,4]{1,0:T(8,128)}', space=vmem, size = 0x1000, scoped, tag = 'scratch operand']
  #allocation6 [shape = 'f32[8,32]{1,0:T(8,128)}', space=vmem, size = 0x1000, scoped, tag = 'scratch operand']
  %s0 = inlined_call_operand.hbm [shape: f32[2,16,32], index: 0, kind: input, shape index: {}]
  %s1 = inlined_call_operand.hbm [shape: f32[32,32], index: 1, kind: input, shape index: {}]
  %s2 = inlined_call_operand.hbm [shape: f32[32,64], index: 2, kind: input, shape index: {}]
  %s3 = inlined_call_operand.hbm [shape: f32[32,32], index: 3, kind: input, shape index: {}]
  %s4 = inlined_call_operand.vmem [shape: f32[1,32], index: 4, kind: input, shape index: {}]
  %s5 = inlined_call_operand.hbm [shape: f32[2,16,32], index: 5, kind: output, shape index: {}]
  %s6 = sld [smem:[#allocation0]]
  $region80: #{tpu_custom_call.1} parent=0
    _
  %s8 = ssub.s32 1, %s6
  %s9 = scalar_select 0, %s8, %s6
  $region1: #{tpu_custom_call.1} parent=0
    #allocation7 [shape = 'u8[16384]{0}', space=vmem, size = 0x4000, scoped, tag = 'input window, operand 0']
    #allocation8 [shape = 's32[2]{0}', space=sflag, size = 0x8, scoped, tag = 'scoped memory for tpu_custom_call.1']
    #allocation9 [shape = 's32[2]{0}', space=sflag, size = 0x8, scoped, tag = 'scoped memory for tpu_custom_call.1']
    #allocation10 [shape = 'u8[16384]{0}', space=vmem, size = 0x4000, scoped, tag = 'input window, operand 1, single buffered']
    #allocation11 [shape = 's32[1]{0}', space=sflag, size = 0x4, scoped, tag = 'scoped memory for tpu_custom_call.1']
    #allocation12 [shape = 'u8[16384]{0}', space=vmem, size = 0x4000, scoped, tag = 'input window, operand 2, single buffered']
    #allocation13 [shape = 'u8[16384]{0}', space=vmem, size = 0x4000, scoped, tag = 'input window, operand 3, single buffered']
    #allocation14 [shape = 's32[1]{0}', space=sflag, size = 0x4, scoped, tag = 'scoped memory for tpu_custom_call.1']
    #allocation15 [shape = 'u8[8192]{0}', space=vmem, size = 0x2000, scoped, tag = 'output window, operand 0']
    %10 = vsyncpa [#allocation8], 0
    %s11 = scalar_lea.sflag [#allocation8], 1
    %12 = vsyncpa %s11, 0
    %13 = vsyncpa [#allocation11], 0
    %14 = vsyncpa [#allocation14], 0
    %15 = vsyncpa [#allocation9], 0
    %s16 = scalar_lea.sflag [#allocation9], 1
    %17 = vsyncpa %s16, 0
    loop: start=0, step=1, limit=6
    $region2: #{tpu_custom_call.1} parent=1 // loop_pre_header
      _
    $region3: #{tpu_custom_call.1} parent=1 // loop_header
      %s19 = sphi 0, %s23
      %p20 = scmp.ge.s32.totalorder %s19, 6
      %s26 = sphi 0, %s38
      %s27 = sphi 0, %s34
      %s28 = sphi 0, %s26
      %s29 = sphi 0, %s27
      %s30 = sphi 0, %s28
      %s31 = sphi 0, %s29
      %s41 = sphi 0, %s43
      %s44 = sphi 0, %s41
      %s45 = sphi 0, %s44
      %s61 = sphi 0, %s45
      %s65 = sphi 0, %s65
      %s67 = sphi 0, %s65
      %s68 = sphi 0, %s67
      %s82 = sphi 0, %s68
      %s86 = sphi 0, %s86
      %s88 = sphi 0, %s86
      %s89 = sphi 0, %s88
      %s103 = sphi 0, %s89
      %s107 = sphi 0, %s107
      %s109 = sphi 0, %s107
      %s110 = sphi 0, %s109
      %s124 = sphi 0, %s110
      %s128 = sphi 0, %s128
      %s130 = sphi 0, %s128
      %s131 = sphi 0, %s130
      %s145 = sphi 0, %s131
      %s153 = sphi 0, %s155
      %s156 = sphi 0, %s153
      %s157 = sphi 0, %s156
      %s173 = sphi 0, %s157
    $region4: #{tpu_custom_call.1} parent=1 // loop_header_branch
      %22 = sbr.rel (%p20) target = $region8
    $region5: #{tpu_custom_call.1} parent=1 // loop_body
      %s24 = ssub.s32 %s19, 1
      %s25 = ssub.s32 %s19, 2
      %s32 = sadd.s32 1, %s27
      %p33 = scmp.ge.s32.totalorder %s32, 2
      %s34 = scalar_select %p33, 0, %s32
      %s35 = sadd.s32 1, %s26
      %s36 = scalar_select %p33, %s35, %s26
      %p37 = scmp.ge.s32.totalorder %s36, 2
      %s38 = scalar_select %p37, 0, %s36
      %s39 = ssub.s32 %s26, %s38
      %p40 = scmp.eq.s32.totalorder %s39, 0
      %s42 = sadd.s32 %s41, 1
      %s43 = scalar_select %p40, %s41, %s42
      %p46 = pneg %p40
      %p47 = scmp.eq.s32.totalorder %s19, 3
      %p48 = por %p46, %p47
      %p49 = scmp.ne.s32.totalorder %s41, %s44
      %p50 = scmp.eq.s32.totalorder %s19, 0
      %p51 = por %p49, %p50
      %p52 = scmp.ne.s32.totalorder %s41, %s44
      %p53 = scmp.eq.s32.totalorder %s24, 3
      %p54 = por %p52, %p53
      %p55 = scmp.ne.s32.totalorder %s44, %s45
      %p56 = scmp.eq.s32.totalorder %s24, 0
      %p57 = por %p55, %p56
      %p58 = scmp.ne.s32.totalorder %s44, %s45
      %p59 = scmp.eq.s32.totalorder %s25, 3
      %p60 = por %p58, %p59
      %p62 = scmp.ne.s32.totalorder %s45, %s61
      %p63 = scmp.eq.s32.totalorder %s25, 0
      %p64 = por %p62, %p63
      %s66 = sadd.s32 %s65, 1
      %p69 = scmp.eq.s32.totalorder %s19, 3
      %p70 = scmp.ne.s32.totalorder %s65, %s67
      %p71 = scmp.eq.s32.totalorder %s19, 0
      %p72 = por %p70, %p71
      %p73 = scmp.ne.s32.totalorder %s65, %s67
      %p74 = scmp.eq.s32.totalorder %s24, 3
      %p75 = por %p73, %p74
      %p76 = scmp.ne.s32.totalorder %s67, %s68
      %p77 = scmp.eq.s32.totalorder %s24, 0
      %p78 = por %p76, %p77
      %p79 = scmp.ne.s32.totalorder %s67, %s68
      %p80 = scmp.eq.s32.totalorder %s25, 3
      %p81 = por %p79, %p80
      %p83 = scmp.ne.s32.totalorder %s68, %s82
      %p84 = scmp.eq.s32.totalorder %s25, 0
      %p85 = por %p83, %p84
      %s87 = sadd.s32 %s86, 1
      %p90 = scmp.eq.s32.totalorder %s19, 3
      %p91 = scmp.ne.s32.totalorder %s86, %s88
      %p92 = scmp.eq.s32.totalorder %s19, 0
      %p93 = por %p91, %p92
      %p94 = scmp.ne.s32.totalorder %s86, %s88
      %p95 = scmp.eq.s32.totalorder %s24, 3
      %p96 = por %p94, %p95
      %p97 = scmp.ne.s32.totalorder %s88, %s89
      %p98 = scmp.eq.s32.totalorder %s24, 0
      %p99 = por %p97, %p98
      %p100 = scmp.ne.s32.totalorder %s88, %s89
      %p101 = scmp.eq.s32.totalorder %s25, 3
      %p102 = por %p100, %p101
      %p104 = scmp.ne.s32.totalorder %s89, %s103
      %p105 = scmp.eq.s32.totalorder %s25, 0
      %p106 = por %p104, %p105
      %s108 = sadd.s32 %s107, 1
      %p111 = scmp.eq.s32.totalorder %s19, 3
      %p112 = scmp.ne.s32.totalorder %s107, %s109
      %p113 = scmp.eq.s32.totalorder %s19, 0
      %p114 = por %p112, %p113
      %p115 = scmp.ne.s32.totalorder %s107, %s109
      %p116 = scmp.eq.s32.totalorder %s24, 3
      %p117 = por %p115, %p116
      %p118 = scmp.ne.s32.totalorder %s109, %s110
      %p119 = scmp.eq.s32.totalorder %s24, 0
      %p120 = por %p118, %p119
      %p121 = scmp.ne.s32.totalorder %s109, %s110
      %p122 = scmp.eq.s32.totalorder %s25, 3
      %p123 = por %p121, %p122
      %p125 = scmp.ne.s32.totalorder %s110, %s124
      %p126 = scmp.eq.s32.totalorder %s25, 0
      %p127 = por %p125, %p126
      %s129 = sadd.s32 %s128, 1
      %p132 = scmp.eq.s32.totalorder %s19, 3
      %p133 = scmp.ne.s32.totalorder %s128, %s130
      %p134 = scmp.eq.s32.totalorder %s19, 0
      %p135 = por %p133, %p134
      %p136 = scmp.ne.s32.totalorder %s128, %s130
      %p137 = scmp.eq.s32.totalorder %s24, 3
      %p138 = por %p136, %p137
      %p139 = scmp.ne.s32.totalorder %s130, %s131
      %p140 = scmp.eq.s32.totalorder %s24, 0
      %p141 = por %p139, %p140
      %p142 = scmp.ne.s32.totalorder %s130, %s131
      %p143 = scmp.eq.s32.totalorder %s25, 3
      %p144 = por %p142, %p143
      %p146 = scmp.ne.s32.totalorder %s131, %s145
      %p147 = scmp.eq.s32.totalorder %s25, 0
      %p148 = por %p146, %p147
      %s149 = ssub.s32 %s26, %s38
      %s150 = ssub.s32 %s27, %s34
      %s151 = sor.u32 %s149, %s150
      %p152 = scmp.eq.s32.totalorder %s151, 0
      %s154 = sadd.s32 %s153, 1
      %s155 = scalar_select %p152, %s153, %s154
      %p158 = pneg %p152
      %p159 = scmp.eq.s32.totalorder %s19, 3
      %p160 = por %p158, %p159
      %p161 = scmp.ne.s32.totalorder %s153, %s156
      %p162 = scmp.eq.s32.totalorder %s19, 0
      %p163 = por %p161, %p162
      %p164 = scmp.ne.s32.totalorder %s153, %s156
      %p165 = scmp.eq.s32.totalorder %s24, 3
      %p166 = por %p164, %p165
      %p167 = scmp.ne.s32.totalorder %s156, %s157
      %p168 = scmp.eq.s32.totalorder %s24, 0
      %p169 = por %p167, %p168
      %p170 = scmp.ne.s32.totalorder %s156, %s157
      %p171 = scmp.eq.s32.totalorder %s25, 3
      %p172 = por %p170, %p171
      %p174 = scmp.ne.s32.totalorder %s157, %s173
      %p175 = scmp.eq.s32.totalorder %s25, 0
      %p176 = por %p174, %p175
      %p177 = scmp.le.s32.totalorder 1, %s19
      %p178 = scmp.lt.s32.totalorder %s19, 5
      %p179 = pnand %p177, %p178
      %p180 = pneg %p179
      // Predicated region
      $region9: #{tpu_custom_call.1} parent=5 // pred_check
        _
      $region10: #{tpu_custom_call.1} parent=5 // pred_check_branch
        %182 = sbr.rel (%p179) target = $region12
      $region11: #{tpu_custom_call.1} parent=5 // pred_region
        %s183 = ssub.s32 %s19, 1
        // Predicated region
        $region13: #{tpu_custom_call.1} parent=11 // pred_check
          %p184 = pneg %p78
        $region14: #{tpu_custom_call.1} parent=11 // pred_check_branch
          %186 = sbr.rel (%p184) target = $region16
        $region15: #{tpu_custom_call.1} parent=11 // pred_region
          %s188 = ssub.s32 512, 512
          %189 = vsyncadd [#allocation11], %s188
          %s190 = sshll.u32 [#allocation10], 4
          %s191 = int_to_ptr.vmem [resolvable:$true] %s190
          %196 = dma.hbm_to_vmem [thread:$0]  %s1, 512, %s191, [#allocation11], 128, 128, 8
        $region16: #{tpu_custom_call.1} parent=11 // pred_fallthru
          _
        // Predicated region
        $region17: #{tpu_custom_call.1} parent=11 // pred_check
          %p197 = pneg %p99
        $region18: #{tpu_custom_call.1} parent=11 // pred_check_branch
          %199 = sbr.rel (%p197) target = $region20
        $region19: #{tpu_custom_call.1} parent=11 // pred_region
          %s201 = ssub.s32 512, 512
          %202 = vsyncadd [#allocation11], %s201
          %s203 = sshll.u32 [#allocation12], 4
          %s204 = int_to_ptr.vmem [resolvable:$true] %s203
          %209 = dma.hbm_to_vmem [thread:$0]  %s2, 512, %s204, [#allocation11], 128, 128, 8
        $region20: #{tpu_custom_call.1} parent=11 // pred_fallthru
          _
        // Predicated region
        $region21: #{tpu_custom_call.1} parent=11 // pred_check
          %p210 = pneg %p120
        $region22: #{tpu_custom_call.1} parent=11 // pred_check_branch
          %212 = sbr.rel (%p210) target = $region24
        $region23: #{tpu_custom_call.1} parent=11 // pred_region
          %s214 = ssub.s32 512, 512
          %215 = vsyncadd [#allocation14], %s214
          %s216 = sshll.u32 [#allocation13], 4
          %s217 = int_to_ptr.vmem [resolvable:$true] %s216
          %222 = dma.hbm_to_vmem [thread:$0]  %s3, 512, %s217, [#allocation14], 128, 128, 8
        $region24: #{tpu_custom_call.1} parent=11 // pred_fallthru
          _
        // Predicated region
        $region25: #{tpu_custom_call.1} parent=11 // pred_check
          %p223 = pneg %p141
        $region26: #{tpu_custom_call.1} parent=11 // pred_check_branch
          %225 = sbr.rel (%p223) target = $region28
        $region27: #{tpu_custom_call.1} parent=11 // pred_region
          _
        $region28: #{tpu_custom_call.1} parent=11 // pred_fallthru
          _
      $region12: #{tpu_custom_call.1} parent=5 // pred_fallthru
        _
      %p226 = scmp.lt.s32.totalorder %s19, 4
      // Predicated region
      $region29: #{tpu_custom_call.1} parent=5 // pred_check
        %p227 = pneg %p226
      $region30: #{tpu_custom_call.1} parent=5 // pred_check_branch
        %229 = sbr.rel (%p227) target = $region32
      $region31: #{tpu_custom_call.1} parent=5 // pred_region
        // Predicated region
        $region33: #{tpu_custom_call.1} parent=31 // pred_check
          %p230 = pneg %p51
        $region34: #{tpu_custom_call.1} parent=31 // pred_check_branch
          %232 = sbr.rel (%p230) target = $region36
        $region35: #{tpu_custom_call.1} parent=31 // pred_region
          %s233 = sand.u32 %s41, 1
          %s234 = scalar_lea.sflag [#allocation8], %s233
          %s235 = sand.u32 %s41, 1
          %s236 = smul.addr %s235, 16
          %s237 = scalar_lea.vmem [#allocation7], %s236
          %s239 = ssub.s32 256, 256
          %240 = vsyncadd %s234, %s239
          %s241 = smul.addr %s26, 2
          %s242 = smul.addr %s241, 128
          %s243 = scalar_lea.hbm %s0, %s242
          %s244 = sshll.u32 %s237, 4
          %s245 = int_to_ptr.vmem [resolvable:$true] %s244
          %250 = dma.hbm_to_vmem [thread:$0]  %s243, 256, %s245, %s234, 128, 128, 8
        $region36: #{tpu_custom_call.1} parent=31 // pred_fallthru
          _
      $region32: #{tpu_custom_call.1} parent=5 // pred_fallthru
        _
      %p251 = scmp.le.s32.totalorder 1, %s19
      %p252 = scmp.lt.s32.totalorder %s19, 5
      %p253 = pnand %p251, %p252
      %p254 = pneg %p253
      // Predicated region
      $region37: #{tpu_custom_call.1} parent=5 // pred_check
        _
      $region38: #{tpu_custom_call.1} parent=5 // pred_check_branch
        %256 = sbr.rel (%p253) target = $region40
      $region39: #{tpu_custom_call.1} parent=5 // pred_region
        %s257 = ssub.s32 %s19, 1
        %s258 = sand.u32 %s44, 1
        %s259 = scalar_lea.sflag [#allocation8], %s258
        %s260 = sand.u32 %s44, 1
        %s261 = smul.addr %s260, 16
        %s262 = scalar_lea.vmem [#allocation7], %s261
        // Predicated region
        $region41: #{tpu_custom_call.1} parent=39 // pred_check
          %p263 = pneg %p57
        $region42: #{tpu_custom_call.1} parent=39 // pred_check_branch
          %265 = sbr.rel (%p263) target = $region44
        $region43: #{tpu_custom_call.1} parent=39 // pred_region
          %266 = dma.done %s259, 256
        $region44: #{tpu_custom_call.1} parent=39 // pred_fallthru
          _
        // Predicated region
        $region45: #{tpu_custom_call.1} parent=39 // pred_check
          %p267 = pneg %p78
        $region46: #{tpu_custom_call.1} parent=39 // pred_check_branch
          %269 = sbr.rel (%p267) target = $region48
        $region47: #{tpu_custom_call.1} parent=39 // pred_region
          %270 = dma.done [#allocation11], 512
        $region48: #{tpu_custom_call.1} parent=39 // pred_fallthru
          _
        // Predicated region
        $region49: #{tpu_custom_call.1} parent=39 // pred_check
          %p271 = pneg %p99
        $region50: #{tpu_custom_call.1} parent=39 // pred_check_branch
          %273 = sbr.rel (%p271) target = $region52
        $region51: #{tpu_custom_call.1} parent=39 // pred_region
          %274 = dma.done [#allocation11], 512
        $region52: #{tpu_custom_call.1} parent=39 // pred_fallthru
          _
        // Predicated region
        $region53: #{tpu_custom_call.1} parent=39 // pred_check
          %p275 = pneg %p120
        $region54: #{tpu_custom_call.1} parent=39 // pred_check_branch
          %277 = sbr.rel (%p275) target = $region56
        $region55: #{tpu_custom_call.1} parent=39 // pred_region
          %278 = dma.done [#allocation14], 512
        $region56: #{tpu_custom_call.1} parent=39 // pred_fallthru
          _
        %s279 = sand.u32 %s44, 1
        %s280 = scalar_lea.sflag [#allocation8], %s279
        %s281 = sand.u32 %s44, 1
        %s282 = smul.addr %s281, 16
        %s283 = scalar_lea.vmem [#allocation7], %s282
        %p284 = pneg %p57
        %p285 = pneg %p54
        %p286 = pneg %p78
        %p287 = pneg %p75
        %p288 = pneg %p99
        %p289 = pneg %p96
        %p290 = pneg %p120
        %p291 = pneg %p117
        %p292 = pneg %p141
        %p293 = pneg %p138
        %p294 = pneg %p169
        %p295 = pneg %p166
        %s296 = sand.u32 %s156, 1
        %s297 = scalar_lea.sflag [#allocation9], %s296
        %s298 = sand.u32 %s156, 1
        %s299 = smul.addr %s298, 8
        %s300 = scalar_lea.vmem [#allocation15], %s299
        %p301 = scmp.eq.s32.totalorder %s29, 0
        // Predicated region
        $region57: #{tpu_custom_call.1} parent=39 // pred_check
          %p302 = pneg %p301
        $region58: #{tpu_custom_call.1} parent=39 // pred_check_branch
          %304 = sbr.rel (%p302) target = $region60
        $region59: #{tpu_custom_call.1} parent=39 // pred_region
          %v305 = vld [vmem:[%s262] sm:$0xff]
          %v306 = vld [vmem:[%s262 + $0x8] sm:$0xff]
          %v307 = vld [vmem:[#allocation12] sm:$0xff]
          %v308 = vld [vmem:[#allocation12 + $0x8] sm:$0xff]
          %v309 = vld [vmem:[#allocation12 + $0x10] sm:$0xff]
          %v310 = vld [vmem:[#allocation12 + $0x18] sm:$0xff]
          %vm311 = vcmask 261120
          %v313 = vsel %vm311, %v305, 0
          %v316 = vsel %vm311, %v306, 0
          %318 = vmatprep.subr.mxu0 0.0
          %319 = vmatpush1.msra.mxu0 0.0
          %320 = vmatprep.subr.mxu0 0.0
          %321 = vmatpush1.msra.mxu0 0.0
          %322 = vmatprep.subr.mxu0 0.0
          %323 = vmatpush1.msra.mxu0 0.0
          %324 = vmatprep.subr.mxu0 0.0
          %325 = vmatpush1.msra.mxu0 0.0
          %326 = vmatprep.subr.mxu0 0.0
          %327 = vmatpush1.msra.mxu0 0.0
          %328 = vmatprep.subr.mxu0 0.0
          %329 = vmatpush1.msra.mxu0 0.0
          %330 = vmatprep.subr.mxu0 0.0
          %331 = vmatpush1.msra.mxu0 0.0
          %332 = vmatprep.subr.mxu0 0.0
          %333 = vmatpush1.msra.mxu0 0.0
          %334 = vmatprep.subr.mxu0 0.0
          %335 = vmatpush1.msra.mxu0 0.0
          %336 = vmatprep.subr.mxu0 0.0
          %337 = vmatpush1.msra.mxu0 0.0
          %338 = vmatprep.subr.mxu0 0.0
          %339 = vmatpush1.msra.mxu0 0.0
          %340 = vmatprep.subr.mxu0 0.0
          %341 = vmatpush1.msra.mxu0 0.0
          %342 = vmatprep.subr.mxu0 0.0
          %343 = vmatpush1.msra.mxu0 %v310
          %344 = vmatprep.subr.mxu0 0.0
          %345 = vmatpush1.msra.mxu0 %v309
          %346 = vmatprep.subr.mxu0 0.0
          %347 = vmatpush1.msra.mxu0 %v308
          %348 = vmatprep.subr.mxu0 0.0
          %349 = vmatpush1.msra.mxu0 %v307
          %350 = vmatprep.subr.mxu0 0.0
          %351 = vmatpush2.msra.mxu0 0.0
          %352 = vmatprep.subr.mxu0 0.0
          %353 = vmatpush2.msra.mxu0 0.0
          %354 = vmatprep.subr.mxu0 0.0
          %355 = vmatpush2.msra.mxu0 0.0
          %356 = vmatprep.subr.mxu0 0.0
          %357 = vmatpush2.msra.mxu0 0.0
          %358 = vmatprep.subr.mxu0 0.0
          %359 = vmatpush2.msra.mxu0 0.0
          %360 = vmatprep.subr.mxu0 0.0
          %361 = vmatpush2.msra.mxu0 0.0
          %362 = vmatprep.subr.mxu0 0.0
          %363 = vmatpush2.msra.mxu0 0.0
          %364 = vmatprep.subr.mxu0 0.0
          %365 = vmatpush2.msra.mxu0 0.0
          %366 = vmatprep.subr.mxu0 0.0
          %367 = vmatpush2.msra.mxu0 0.0
          %368 = vmatprep.subr.mxu0 0.0
          %369 = vmatpush2.msra.mxu0 0.0
          %370 = vmatprep.subr.mxu0 0.0
          %371 = vmatpush2.msra.mxu0 0.0
          %372 = vmatprep.subr.mxu0 0.0
          %373 = vmatpush2.msra.mxu0 0.0
          %374 = vmatprep.subr.mxu0 0.0
          %375 = vmatpush2.msra.mxu0 0.0
          %376 = vmatprep.subr.mxu0 0.0
          %377 = vmatpush2.msra.mxu0 0.0
          %378 = vmatprep.subr.mxu0 0.0
          %379 = vmatpush2.msra.mxu0 0.0
          %380 = vmatprep.subr.mxu0 0.0
          %381 = vmatpush2.msra.mxu0 0.0
          %382 = vmatprep.mubr.f32.mxu0 0.0
          %383 = vmatmul.mubr.f32.gmra.mxu0 %v313
          %v384 = vpop.f32.mrf.mxu0
          %v385 = vadd.f32 0.0, %v384
          %v386 = vpop.f32.mrf.mxu0
          %387 = vmatprep.mubr.f32.mxu0 0.0
          %388 = vmatmul.mubr.f32.gmra.mxu0 %v316
          %v389 = vpop.f32.mrf.mxu0
          %v390 = vadd.f32 0.0, %v389
          %v391 = vpop.f32.mrf.mxu0
          %392 = vdwg.mxu0
          %393 = vst.msk [vmem:[#allocation2] sm:$0xff] %vm311, %v385
          %394 = vst.msk [vmem:[#allocation2 + $0x8] sm:$0xff] %vm311, %v390
          %397 = vrot.lane.b32.xlu0 %v385, 96
          %v398 = vpop.permute.xlu0 %397
          %399 = vrot.lane.b32.xlu0 %v390, 96
          %v400 = vpop.permute.xlu0 %399
          %403 = vst.msk [vmem:[#allocation3] sm:$0xff] %vm311, %v398
          %404 = vst.msk [vmem:[#allocation3 + $0x8] sm:$0xff] %vm311, %v400
        $region60: #{tpu_custom_call.1} parent=39 // pred_fallthru
          _
        %s405 = smul.u32 %s29, 8
        %s406 = scalar_lea.vmem %s262, %s405 [#allocation7]
        %v407 = vld [vmem:[%s406] sm:$0xff]
        %v408 = vld [vmem:[#allocation10] sm:$0xff]
        %v409 = vld [vmem:[#allocation10 + $0x8] sm:$0xff]
        %v410 = vld [vmem:[#allocation10 + $0x10] sm:$0xff]
        %v411 = vld [vmem:[#allocation10 + $0x18] sm:$0xff]
        %vm412 = vcmask 261120
        %v414 = vsel %vm412, %v407, 0
        %416 = vmatprep.subr.mxu0 0.0
        %417 = vmatpush1.msra.mxu0 0.0
        %418 = vmatprep.subr.mxu0 0.0
        %419 = vmatpush1.msra.mxu0 0.0
        %420 = vmatprep.subr.mxu0 0.0
        %421 = vmatpush1.msra.mxu0 0.0
        %422 = vmatprep.subr.mxu0 0.0
        %423 = vmatpush1.msra.mxu0 0.0
        %424 = vmatprep.subr.mxu0 0.0
        %425 = vmatpush1.msra.mxu0 0.0
        %426 = vmatprep.subr.mxu0 0.0
        %427 = vmatpush1.msra.mxu0 0.0
        %428 = vmatprep.subr.mxu0 0.0
        %429 = vmatpush1.msra.mxu0 0.0
        %430 = vmatprep.subr.mxu0 0.0
        %431 = vmatpush1.msra.mxu0 0.0
        %432 = vmatprep.subr.mxu0 0.0
        %433 = vmatpush1.msra.mxu0 0.0
        %434 = vmatprep.subr.mxu0 0.0
        %435 = vmatpush1.msra.mxu0 0.0
        %436 = vmatprep.subr.mxu0 0.0
        %437 = vmatpush1.msra.mxu0 0.0
        %438 = vmatprep.subr.mxu0 0.0
        %439 = vmatpush1.msra.mxu0 0.0
        %440 = vmatprep.subr.mxu0 0.0
        %441 = vmatpush1.msra.mxu0 %v411
        %442 = vmatprep.subr.mxu0 0.0
        %443 = vmatpush1.msra.mxu0 %v410
        %444 = vmatprep.subr.mxu0 0.0
        %445 = vmatpush1.msra.mxu0 %v409
        %446 = vmatprep.subr.mxu0 0.0
        %447 = vmatpush1.msra.mxu0 %v408
        %448 = vmatprep.subr.mxu0 0.0
        %449 = vmatpush2.msra.mxu0 0.0
        %450 = vmatprep.subr.mxu0 0.0
        %451 = vmatpush2.msra.mxu0 0.0
        %452 = vmatprep.subr.mxu0 0.0
        %453 = vmatpush2.msra.mxu0 0.0
        %454 = vmatprep.subr.mxu0 0.0
        %455 = vmatpush2.msra.mxu0 0.0
        %456 = vmatprep.subr.mxu0 0.0
        %457 = vmatpush2.msra.mxu0 0.0
        %458 = vmatprep.subr.mxu0 0.0
        %459 = vmatpush2.msra.mxu0 0.0
        %460 = vmatprep.subr.mxu0 0.0
        %461 = vmatpush2.msra.mxu0 0.0
        %462 = vmatprep.subr.mxu0 0.0
        %463 = vmatpush2.msra.mxu0 0.0
        %464 = vmatprep.subr.mxu0 0.0
        %465 = vmatpush2.msra.mxu0 0.0
        %466 = vmatprep.subr.mxu0 0.0
        %467 = vmatpush2.msra.mxu0 0.0
        %468 = vmatprep.subr.mxu0 0.0
        %469 = vmatpush2.msra.mxu0 0.0
        %470 = vmatprep.subr.mxu0 0.0
        %471 = vmatpush2.msra.mxu0 0.0
        %472 = vmatprep.subr.mxu0 0.0
        %473 = vmatpush2.msra.mxu0 0.0
        %474 = vmatprep.subr.mxu0 0.0
        %475 = vmatpush2.msra.mxu0 0.0
        %476 = vmatprep.subr.mxu0 0.0
        %477 = vmatpush2.msra.mxu0 0.0
        %478 = vmatprep.subr.mxu0 0.0
        %479 = vmatpush2.msra.mxu0 0.0
        %480 = vmatprep.mubr.f32.mxu0 0.0
        %481 = vmatmul.mubr.f32.gmra.mxu0 %v414
        %v482 = vpop.f32.mrf.mxu0
        %v483 = vadd.f32 0.0, %v482
        %v484 = vpop.f32.mrf.mxu0
        %485 = vdwg.mxu0
        %v486 = vmul.f32 %v483, 0.17677669
        %vm487 = vcmask 31744
        %488 = vst.msk [vmem:[#allocation4] sm:$0xff] %vm487, -inf
        %489 = vst.msk [vmem:[#allocation5] sm:$0xff] %vm487, 0.0
        %490 = vst.msk [vmem:[#allocation6] sm:$0xff] %vm412, 0.0
        // While loop
        $region61: #{tpu_custom_call.1} parent=39 // loop_pre_header
          _
        $region62: #{tpu_custom_call.1} parent=39 // loop_header
          %s492 = sphi 0, %s494
          %p493 = scmp.ge.s32.totalorder %s492, %s29
        $region63: #{tpu_custom_call.1} parent=39 // loop_header_branch
          %496 = sbr.rel (%p493) target = $region67
        $region64: #{tpu_custom_call.1} parent=39 // loop_body
          %s497 = smul.u32 %s492, 8
          %s498 = scalar_lea.vmem [#allocation2], %s497
          %v499 = vld [vmem:[%s498] sm:$0xff]
          %s500 = scalar_lea.vmem [#allocation3], %s497
          %v501 = vld [vmem:[%s500] sm:$0xff]
          %vm502 = vcmask 64512
          %v504 = vsel %vm502, %v486, 0
          %v507 = vsel %vm502, %v499, 0
          %509 = vmatprep.subr.mxu0 0.0
          %510 = vmatpush1.xpose.msra.mxu0 0.0
          %511 = vmatprep.subr.mxu0 0.0
          %512 = vmatpush1.xpose.msra.mxu0 0.0
          %513 = vmatprep.subr.mxu0 0.0
          %514 = vmatpush1.xpose.msra.mxu0 0.0
          %515 = vmatprep.subr.mxu0 0.0
          %516 = vmatpush1.xpose.msra.mxu0 0.0
          %517 = vmatprep.subr.mxu0 0.0
          %518 = vmatpush1.xpose.msra.mxu0 0.0
          %519 = vmatprep.subr.mxu0 0.0
          %520 = vmatpush1.xpose.msra.mxu0 0.0
          %521 = vmatprep.subr.mxu0 0.0
          %522 = vmatpush1.xpose.msra.mxu0 0.0
          %523 = vmatprep.subr.mxu0 0.0
          %524 = vmatpush1.xpose.msra.mxu0 0.0
          %525 = vmatprep.subr.mxu0 0.0
          %526 = vmatpush1.xpose.msra.mxu0 0.0
          %527 = vmatprep.subr.mxu0 0.0
          %528 = vmatpush1.xpose.msra.mxu0 0.0
          %529 = vmatprep.subr.mxu0 0.0
          %530 = vmatpush1.xpose.msra.mxu0 0.0
          %531 = vmatprep.subr.mxu0 0.0
          %532 = vmatpush1.xpose.msra.mxu0 0.0
          %533 = vmatprep.subr.mxu0 0.0
          %534 = vmatpush1.xpose.msra.mxu0 0.0
          %535 = vmatprep.subr.mxu0 0.0
          %536 = vmatpush1.xpose.msra.mxu0 0.0
          %537 = vmatprep.subr.mxu0 0.0
          %538 = vmatpush1.xpose.msra.mxu0 0.0
          %539 = vmatprep.subr.mxu0 0.0
          %540 = vmatpush1.xpose.msra.mxu0 %v507
          %541 = vmatprep.subr.mxu0 0.0
          %542 = vmatpush2.xpose.msra.mxu0 0.0
          %543 = vmatprep.subr.mxu0 0.0
          %544 = vmatpush2.xpose.msra.mxu0 0.0
          %545 = vmatprep.subr.mxu0 0.0
          %546 = vmatpush2.xpose.msra.mxu0 0.0
          %547 = vmatprep.subr.mxu0 0.0
          %548 = vmatpush2.xpose.msra.mxu0 0.0
          %549 = vmatprep.subr.mxu0 0.0
          %550 = vmatpush2.xpose.msra.mxu0 0.0
          %551 = vmatprep.subr.mxu0 0.0
          %552 = vmatpush2.xpose.msra.mxu0 0.0
          %553 = vmatprep.subr.mxu0 0.0
          %554 = vmatpush2.xpose.msra.mxu0 0.0
          %555 = vmatprep.subr.mxu0 0.0
          %556 = vmatpush2.xpose.msra.mxu0 0.0
          %557 = vmatprep.subr.mxu0 0.0
          %558 = vmatpush2.xpose.msra.mxu0 0.0
          %559 = vmatprep.subr.mxu0 0.0
          %560 = vmatpush2.xpose.msra.mxu0 0.0
          %561 = vmatprep.subr.mxu0 0.0
          %562 = vmatpush2.xpose.msra.mxu0 0.0
          %563 = vmatprep.subr.mxu0 0.0
          %564 = vmatpush2.xpose.msra.mxu0 0.0
          %565 = vmatprep.subr.mxu0 0.0
          %566 = vmatpush2.xpose.msra.mxu0 0.0
          %567 = vmatprep.subr.mxu0 0.0
          %568 = vmatpush2.xpose.msra.mxu0 0.0
          %569 = vmatprep.subr.mxu0 0.0
          %570 = vmatpush2.xpose.msra.mxu0 0.0
          %571 = vmatprep.subr.mxu0 0.0
          %572 = vmatpush2.xpose.msra.mxu0 0.0
          %573 = vmatprep.mubr.f32.mxu0 0.0
          %574 = vmatmul.mubr.f32.gmra.mxu0 %v504
          %v575 = vpop.f32.mrf.mxu0
          %v576 = vadd.f32 0.0, %v575
          %v577 = vpop.f32.mrf.mxu0
          %578 = vdwg.mxu0
          %v579 = vld [vmem:[#allocation4] sm:$0xff]
          %v580 = vsel %vm502, %v576, -inf
          %581 = vmax.xlane.f32.xlu0 %v580
          %v582 = vpop.xlane.xlu0 %581
          %v583 = vmax.f32 %v579, %v582
          %v584 = vsub.f32 %v579, %v583
          %v585 = vmul.f32 %v584, 1.442695
          %v586 = vpow.pop %v585
          %588 = vset.pattern.permute.xlu0 0
          %589 = vperm.xlu0 %588, %v583
          %v590 = vpop.permute.xlu0 %589
          %v592 = vsub.f32 %v576, %v590
          %v593 = vmul.f32 %v592, 1.442695
          %v594 = vpow.pop %v593
          %v595 = vld [vmem:[#allocation5] sm:$0xff]
          %v596 = vmul.f32 %v586, %v595
          %v597 = vsel %vm502, %v594, 0.0
          %598 = vadd.xlane.f32.xlu0 %v597
          %v599 = vpop.xlane.xlu0 %598
          %v600 = vadd.f32 %v596, %v599
          %vm601 = vcmask 7168
          %602 = vst.msk [vmem:[#allocation5] sm:$0xff] %vm601, %v600
          %v603 = vld [vmem:[#allocation6] sm:$0xff]
          %605 = vset.pattern.permute.xlu0 0
          %606 = vperm.xlu0 %605, %v586
          %v607 = vpop.permute.xlu0 %606
          %v609 = vmul.f32 %v607, %v603
          %v611 = vsel %vm502, %v594, 0
          %613 = vmatprep.subr.mxu0 0.0
          %614 = vmatpush1.msra.mxu0 0.0
          %615 = vmatprep.subr.mxu0 0.0
          %616 = vmatpush1.msra.mxu0 0.0
          %617 = vmatprep.subr.mxu0 0.0
          %618 = vmatpush1.msra.mxu0 0.0
          %619 = vmatprep.subr.mxu0 0.0
          %620 = vmatpush1.msra.mxu0 0.0
          %621 = vmatprep.subr.mxu0 0.0
          %622 = vmatpush1.msra.mxu0 0.0
          %623 = vmatprep.subr.mxu0 0.0
          %624 = vmatpush1.msra.mxu0 0.0
          %625 = vmatprep.subr.mxu0 0.0
          %626 = vmatpush1.msra.mxu0 0.0
          %627 = vmatprep.subr.mxu0 0.0
          %628 = vmatpush1.msra.mxu0 0.0
          %629 = vmatprep.subr.mxu0 0.0
          %630 = vmatpush1.msra.mxu0 0.0
          %631 = vmatprep.subr.mxu0 0.0
          %632 = vmatpush1.msra.mxu0 0.0
          %633 = vmatprep.subr.mxu0 0.0
          %634 = vmatpush1.msra.mxu0 0.0
          %635 = vmatprep.subr.mxu0 0.0
          %636 = vmatpush1.msra.mxu0 0.0
          %637 = vmatprep.subr.mxu0 0.0
          %638 = vmatpush1.msra.mxu0 0.0
          %639 = vmatprep.subr.mxu0 0.0
          %640 = vmatpush1.msra.mxu0 0.0
          %641 = vmatprep.subr.mxu0 0.0
          %642 = vmatpush1.msra.mxu0 0.0
          %643 = vmatprep.subr.mxu0 0.0
          %644 = vmatpush1.msra.mxu0 %v501
          %645 = vmatprep.subr.mxu0 0.0
          %646 = vmatpush2.msra.mxu0 0.0
          %647 = vmatprep.subr.mxu0 0.0
          %648 = vmatpush2.msra.mxu0 0.0
          %649 = vmatprep.subr.mxu0 0.0
          %650 = vmatpush2.msra.mxu0 0.0
          %651 = vmatprep.subr.mxu0 0.0
          %652 = vmatpush2.msra.mxu0 0.0
          %653 = vmatprep.subr.mxu0 0.0
          %654 = vmatpush2.msra.mxu0 0.0
          %655 = vmatprep.subr.mxu0 0.0
          %656 = vmatpush2.msra.mxu0 0.0
          %657 = vmatprep.subr.mxu0 0.0
          %658 = vmatpush2.msra.mxu0 0.0
          %659 = vmatprep.subr.mxu0 0.0
          %660 = vmatpush2.msra.mxu0 0.0
          %661 = vmatprep.subr.mxu0 0.0
          %662 = vmatpush2.msra.mxu0 0.0
          %663 = vmatprep.subr.mxu0 0.0
          %664 = vmatpush2.msra.mxu0 0.0
          %665 = vmatprep.subr.mxu0 0.0
          %666 = vmatpush2.msra.mxu0 0.0
          %667 = vmatprep.subr.mxu0 0.0
          %668 = vmatpush2.msra.mxu0 0.0
          %669 = vmatprep.subr.mxu0 0.0
          %670 = vmatpush2.msra.mxu0 0.0
          %671 = vmatprep.subr.mxu0 0.0
          %672 = vmatpush2.msra.mxu0 0.0
          %673 = vmatprep.subr.mxu0 0.0
          %674 = vmatpush2.msra.mxu0 0.0
          %675 = vmatprep.subr.mxu0 0.0
          %676 = vmatpush2.msra.mxu0 0.0
          %677 = vmatprep.mubr.f32.mxu0 0.0
          %678 = vmatmul.mubr.f32.gmra.mxu0 %v611
          %v679 = vpop.f32.mrf.mxu0
          %v680 = vadd.f32 0.0, %v679
          %v681 = vpop.f32.mrf.mxu0
          %682 = vdwg.mxu0
          %v683 = vadd.f32 %v609, %v680
          %684 = vst.msk [vmem:[#allocation6] sm:$0xff] %vm502, %v683
          %685 = vst.msk [vmem:[#allocation4] sm:$0xff] %vm601, %v583
          %686 = vrot.lane.b32.xlu0 %v486, 120
          %v687 = vpop.permute.xlu0 %686
          %688 = vrot.lane.b32.xlu0 %v499, 120
          %v689 = vpop.permute.xlu0 %688
          %v690 = vsel %vm502, %v687, 0
          %v692 = vsel %vm502, %v689, 0
          %694 = vmatprep.subr.mxu0 0.0
          %695 = vmatpush1.xpose.msra.mxu0 0.0
          %696 = vmatprep.subr.mxu0 0.0
          %697 = vmatpush1.xpose.msra.mxu0 0.0
          %698 = vmatprep.subr.mxu0 0.0
          %699 = vmatpush1.xpose.msra.mxu0 0.0
          %700 = vmatprep.subr.mxu0 0.0
          %701 = vmatpush1.xpose.msra.mxu0 0.0
          %702 = vmatprep.subr.mxu0 0.0
          %703 = vmatpush1.xpose.msra.mxu0 0.0
          %704 = vmatprep.subr.mxu0 0.0
          %705 = vmatpush1.xpose.msra.mxu0 0.0
          %706 = vmatprep.subr.mxu0 0.0
          %707 = vmatpush1.xpose.msra.mxu0 0.0
          %708 = vmatprep.subr.mxu0 0.0
          %709 = vmatpush1.xpose.msra.mxu0 0.0
          %710 = vmatprep.subr.mxu0 0.0
          %711 = vmatpush1.xpose.msra.mxu0 0.0
          %712 = vmatprep.subr.mxu0 0.0
          %713 = vmatpush1.xpose.msra.mxu0 0.0
          %714 = vmatprep.subr.mxu0 0.0
          %715 = vmatpush1.xpose.msra.mxu0 0.0
          %716 = vmatprep.subr.mxu0 0.0
          %717 = vmatpush1.xpose.msra.mxu0 0.0
          %718 = vmatprep.subr.mxu0 0.0
          %719 = vmatpush1.xpose.msra.mxu0 0.0
          %720 = vmatprep.subr.mxu0 0.0
          %721 = vmatpush1.xpose.msra.mxu0 0.0
          %722 = vmatprep.subr.mxu0 0.0
          %723 = vmatpush1.xpose.msra.mxu0 0.0
          %724 = vmatprep.subr.mxu0 0.0
          %725 = vmatpush1.xpose.msra.mxu0 %v692
          %726 = vmatprep.subr.mxu0 0.0
          %727 = vmatpush2.xpose.msra.mxu0 0.0
          %728 = vmatprep.subr.mxu0 0.0
          %729 = vmatpush2.xpose.msra.mxu0 0.0
          %730 = vmatprep.subr.mxu0 0.0
          %731 = vmatpush2.xpose.msra.mxu0 0.0
          %732 = vmatprep.subr.mxu0 0.0
          %733 = vmatpush2.xpose.msra.mxu0 0.0
          %734 = vmatprep.subr.mxu0 0.0
          %735 = vmatpush2.xpose.msra.mxu0 0.0
          %736 = vmatprep.subr.mxu0 0.0
          %737 = vmatpush2.xpose.msra.mxu0 0.0
          %738 = vmatprep.subr.mxu0 0.0
          %739 = vmatpush2.xpose.msra.mxu0 0.0
          %740 = vmatprep.subr.mxu0 0.0
          %741 = vmatpush2.xpose.msra.mxu0 0.0
          %742 = vmatprep.subr.mxu0 0.0
          %743 = vmatpush2.xpose.msra.mxu0 0.0
          %744 = vmatprep.subr.mxu0 0.0
          %745 = vmatpush2.xpose.msra.mxu0 0.0
          %746 = vmatprep.subr.mxu0 0.0
          %747 = vmatpush2.xpose.msra.mxu0 0.0
          %748 = vmatprep.subr.mxu0 0.0
          %749 = vmatpush2.xpose.msra.mxu0 0.0
          %750 = vmatprep.subr.mxu0 0.0
          %751 = vmatpush2.xpose.msra.mxu0 0.0
          %752 = vmatprep.subr.mxu0 0.0
          %753 = vmatpush2.xpose.msra.mxu0 0.0
          %754 = vmatprep.subr.mxu0 0.0
          %755 = vmatpush2.xpose.msra.mxu0 0.0
          %756 = vmatprep.subr.mxu0 0.0
          %757 = vmatpush2.xpose.msra.mxu0 0.0
          %758 = vmatprep.mubr.f32.mxu0 0.0
          %759 = vmatmul.mubr.f32.gmra.mxu0 %v690
          %v760 = vpop.f32.mrf.mxu0
          %v761 = vadd.f32 0.0, %v760
          %v762 = vpop.f32.mrf.mxu0
          %763 = vdwg.mxu0
          %v764 = vld [vmem:[#allocation4] sm:$0xff]
          %v765 = vsel %vm502, %v761, -inf
          %766 = vmax.xlane.f32.xlu0 %v765
          %v767 = vpop.xlane.xlu0 %766
          %v768 = vmax.f32 %v764, %v767
          %v769 = vsub.f32 %v764, %v768
          %v770 = vmul.f32 %v769, 1.442695
          %v771 = vpow.pop %v770
          %773 = vset.pattern.permute.xlu0 1
          %774 = vperm.xlu0 %773, %v768
          %v775 = vpop.permute.xlu0 %774
          %v777 = vsub.f32 %v761, %v775
          %v778 = vmul.f32 %v777, 1.442695
          %v779 = vpow.pop %v778
          %v780 = vld [vmem:[#allocation5] sm:$0xff]
          %v781 = vmul.f32 %v771, %v780
          %v782 = vsel %vm502, %v779, 0.0
          %783 = vadd.xlane.f32.xlu0 %v782
          %v784 = vpop.xlane.xlu0 %783
          %v785 = vadd.f32 %v781, %v784
          %vm786 = vcmask 15368
          %787 = vst.msk [vmem:[#allocation5] sm:$0xff] %vm786, %v785
          %v788 = vld [vmem:[#allocation6] sm:$0xff]
          %790 = vset.pattern.permute.xlu0 1
          %791 = vperm.xlu0 %790, %v771
          %v792 = vpop.permute.xlu0 %791
          %v794 = vmul.f32 %v792, %v788
          %796 = vrot.lane.b32.xlu0 %v501, 120
          %v797 = vpop.permute.xlu0 %796
          %v800 = vsel %vm502, %v779, 0
          %802 = vmatprep.subr.mxu0 0.0
          %803 = vmatpush1.msra.mxu0 0.0
          %804 = vmatprep.subr.mxu0 0.0
          %805 = vmatpush1.msra.mxu0 0.0
          %806 = vmatprep.subr.mxu0 0.0
          %807 = vmatpush1.msra.mxu0 0.0
          %808 = vmatprep.subr.mxu0 0.0
          %809 = vmatpush1.msra.mxu0 0.0
          %810 = vmatprep.subr.mxu0 0.0
          %811 = vmatpush1.msra.mxu0 0.0
          %812 = vmatprep.subr.mxu0 0.0
          %813 = vmatpush1.msra.mxu0 0.0
          %814 = vmatprep.subr.mxu0 0.0
          %815 = vmatpush1.msra.mxu0 0.0
          %816 = vmatprep.subr.mxu0 0.0
          %817 = vmatpush1.msra.mxu0 0.0
          %818 = vmatprep.subr.mxu0 0.0
          %819 = vmatpush1.msra.mxu0 0.0
          %820 = vmatprep.subr.mxu0 0.0
          %821 = vmatpush1.msra.mxu0 0.0
          %822 = vmatprep.subr.mxu0 0.0
          %823 = vmatpush1.msra.mxu0 0.0
          %824 = vmatprep.subr.mxu0 0.0
          %825 = vmatpush1.msra.mxu0 0.0
          %826 = vmatprep.subr.mxu0 0.0
          %827 = vmatpush1.msra.mxu0 0.0
          %828 = vmatprep.subr.mxu0 0.0
          %829 = vmatpush1.msra.mxu0 0.0
          %830 = vmatprep.subr.mxu0 0.0
          %831 = vmatpush1.msra.mxu0 0.0
          %832 = vmatprep.subr.mxu0 0.0
          %833 = vmatpush1.msra.mxu0 %v797
          %834 = vmatprep.subr.mxu0 0.0
          %835 = vmatpush2.msra.mxu0 0.0
          %836 = vmatprep.subr.mxu0 0.0
          %837 = vmatpush2.msra.mxu0 0.0
          %838 = vmatprep.subr.mxu0 0.0
          %839 = vmatpush2.msra.mxu0 0.0
          %840 = vmatprep.subr.mxu0 0.0
          %841 = vmatpush2.msra.mxu0 0.0
          %842 = vmatprep.subr.mxu0 0.0
          %843 = vmatpush2.msra.mxu0 0.0
          %844 = vmatprep.subr.mxu0 0.0
          %845 = vmatpush2.msra.mxu0 0.0
          %846 = vmatprep.subr.mxu0 0.0
          %847 = vmatpush2.msra.mxu0 0.0
          %848 = vmatprep.subr.mxu0 0.0
          %849 = vmatpush2.msra.mxu0 0.0
          %850 = vmatprep.subr.mxu0 0.0
          %851 = vmatpush2.msra.mxu0 0.0
          %852 = vmatprep.subr.mxu0 0.0
          %853 = vmatpush2.msra.mxu0 0.0
          %854 = vmatprep.subr.mxu0 0.0
          %855 = vmatpush2.msra.mxu0 0.0
          %856 = vmatprep.subr.mxu0 0.0
          %857 = vmatpush2.msra.mxu0 0.0
          %858 = vmatprep.subr.mxu0 0.0
          %859 = vmatpush2.msra.mxu0 0.0
          %860 = vmatprep.subr.mxu0 0.0
          %861 = vmatpush2.msra.mxu0 0.0
          %862 = vmatprep.subr.mxu0 0.0
          %863 = vmatpush2.msra.mxu0 0.0
          %864 = vmatprep.subr.mxu0 0.0
          %865 = vmatpush2.msra.mxu0 0.0
          %866 = vmatprep.mubr.f32.mxu0 0.0
          %867 = vmatmul.mubr.f32.gmra.mxu0 %v800
          %v868 = vpop.f32.mrf.mxu0
          %v869 = vadd.f32 0.0, %v868
          %v870 = vpop.f32.mrf.mxu0
          %871 = vdwg.mxu0
          %873 = vrot.lane.b32.xlu0 %v869, 8
          %v874 = vpop.permute.xlu0 %873
          %v876 = vadd.f32 %v794, %v874
          %vm877 = vcmask 130112
          %878 = vst.msk [vmem:[#allocation6] sm:$0xff] %vm877, %v876
          %879 = vst.msk [vmem:[#allocation4] sm:$0xff] %vm786, %v768
          %880 = vrot.lane.b32.xlu0 %v486, 112
          %v881 = vpop.permute.xlu0 %880
          %882 = vrot.lane.b32.xlu0 %v499, 112
          %v883 = vpop.permute.xlu0 %882
          %v884 = vsel %vm502, %v881, 0
          %v886 = vsel %vm502, %v883, 0
          %888 = vmatprep.subr.mxu0 0.0
          %889 = vmatpush1.xpose.msra.mxu0 0.0
          %890 = vmatprep.subr.mxu0 0.0
          %891 = vmatpush1.xpose.msra.mxu0 0.0
          %892 = vmatprep.subr.mxu0 0.0
          %893 = vmatpush1.xpose.msra.mxu0 0.0
          %894 = vmatprep.subr.mxu0 0.0
          %895 = vmatpush1.xpose.msra.mxu0 0.0
          %896 = vmatprep.subr.mxu0 0.0
          %897 = vmatpush1.xpose.msra.mxu0 0.0
          %898 = vmatprep.subr.mxu0 0.0
          %899 = vmatpush1.xpose.msra.mxu0 0.0
          %900 = vmatprep.subr.mxu0 0.0
          %901 = vmatpush1.xpose.msra.mxu0 0.0
          %902 = vmatprep.subr.mxu0 0.0
          %903 = vmatpush1.xpose.msra.mxu0 0.0
          %904 = vmatprep.subr.mxu0 0.0
          %905 = vmatpush1.xpose.msra.mxu0 0.0
          %906 = vmatprep.subr.mxu0 0.0
          %907 = vmatpush1.xpose.msra.mxu0 0.0
          %908 = vmatprep.subr.mxu0 0.0
          %909 = vmatpush1.xpose.msra.mxu0 0.0
          %910 = vmatprep.subr.mxu0 0.0
          %911 = vmatpush1.xpose.msra.mxu0 0.0
          %912 = vmatprep.subr.mxu0 0.0
          %913 = vmatpush1.xpose.msra.mxu0 0.0
          %914 = vmatprep.subr.mxu0 0.0
          %915 = vmatpush1.xpose.msra.mxu0 0.0
          %916 = vmatprep.subr.mxu0 0.0
          %917 = vmatpush1.xpose.msra.mxu0 0.0
          %918 = vmatprep.subr.mxu0 0.0
          %919 = vmatpush1.xpose.msra.mxu0 %v886
          %920 = vmatprep.subr.mxu0 0.0
          %921 = vmatpush2.xpose.msra.mxu0 0.0
          %922 = vmatprep.subr.mxu0 0.0
          %923 = vmatpush2.xpose.msra.mxu0 0.0
          %924 = vmatprep.subr.mxu0 0.0
          %925 = vmatpush2.xpose.msra.mxu0 0.0
          %926 = vmatprep.subr.mxu0 0.0
          %927 = vmatpush2.xpose.msra.mxu0 0.0
          %928 = vmatprep.subr.mxu0 0.0
          %929 = vmatpush2.xpose.msra.mxu0 0.0
          %930 = vmatprep.subr.mxu0 0.0
          %931 = vmatpush2.xpose.msra.mxu0 0.0
          %932 = vmatprep.subr.mxu0 0.0
          %933 = vmatpush2.xpose.msra.mxu0 0.0
          %934 = vmatprep.subr.mxu0 0.0
          %935 = vmatpush2.xpose.msra.mxu0 0.0
          %936 = vmatprep.subr.mxu0 0.0
          %937 = vmatpush2.xpose.msra.mxu0 0.0
          %938 = vmatprep.subr.mxu0 0.0
          %939 = vmatpush2.xpose.msra.mxu0 0.0
          %940 = vmatprep.subr.mxu0 0.0
          %941 = vmatpush2.xpose.msra.mxu0 0.0
          %942 = vmatprep.subr.mxu0 0.0
          %943 = vmatpush2.xpose.msra.mxu0 0.0
          %944 = vmatprep.subr.mxu0 0.0
          %945 = vmatpush2.xpose.msra.mxu0 0.0
          %946 = vmatprep.subr.mxu0 0.0
          %947 = vmatpush2.xpose.msra.mxu0 0.0
          %948 = vmatprep.subr.mxu0 0.0
          %949 = vmatpush2.xpose.msra.mxu0 0.0
          %950 = vmatprep.subr.mxu0 0.0
          %951 = vmatpush2.xpose.msra.mxu0 0.0
          %952 = vmatprep.mubr.f32.mxu0 0.0
          %953 = vmatmul.mubr.f32.gmra.mxu0 %v884
          %v954 = vpop.f32.mrf.mxu0
          %v955 = vadd.f32 0.0, %v954
          %v956 = vpop.f32.mrf.mxu0
          %957 = vdwg.mxu0
          %v958 = vld [vmem:[#allocation4] sm:$0xff]
          %v959 = vsel %vm502, %v955, -inf
          %960 = vmax.xlane.f32.xlu0 %v959
          %v961 = vpop.xlane.xlu0 %960
          %v962 = vmax.f32 %v958, %v961
          %v963 = vsub.f32 %v958, %v962
          %v964 = vmul.f32 %v963, 1.442695
          %v965 = vpow.pop %v964
          %967 = vset.pattern.permute.xlu0 2
          %968 = vperm.xlu0 %967, %v962
          %v969 = vpop.permute.xlu0 %968
          %v971 = vsub.f32 %v955, %v969
          %v972 = vmul.f32 %v971, 1.442695
          %v973 = vpow.pop %v972
          %v974 = vld [vmem:[#allocation5] sm:$0xff]
          %v975 = vmul.f32 %v965, %v974
          %v976 = vsel %vm502, %v973, 0.0
          %977 = vadd.xlane.f32.xlu0 %v976
          %v978 = vpop.xlane.xlu0 %977
          %v979 = vadd.f32 %v975, %v978
          %vm980 = vcmask 23568
          %981 = vst.msk [vmem:[#allocation5] sm:$0xff] %vm980, %v979
          %v982 = vld [vmem:[#allocation6] sm:$0xff]
          %984 = vset.pattern.permute.xlu0 2
          %985 = vperm.xlu0 %984, %v965
          %v986 = vpop.permute.xlu0 %985
          %v988 = vmul.f32 %v986, %v982
          %989 = vrot.lane.b32.xlu0 %v501, 112
          %v990 = vpop.permute.xlu0 %989
          %v993 = vsel %vm502, %v973, 0
          %995 = vmatprep.subr.mxu0 0.0
          %996 = vmatpush1.msra.mxu0 0.0
          %997 = vmatprep.subr.mxu0 0.0
          %998 = vmatpush1.msra.mxu0 0.0
          %999 = vmatprep.subr.mxu0 0.0
          %1000 = vmatpush1.msra.mxu0 0.0
          %1001 = vmatprep.subr.mxu0 0.0
          %1002 = vmatpush1.msra.mxu0 0.0
          %1003 = vmatprep.subr.mxu0 0.0
          %1004 = vmatpush1.msra.mxu0 0.0
          %1005 = vmatprep.subr.mxu0 0.0
          %1006 = vmatpush1.msra.mxu0 0.0
          %1007 = vmatprep.subr.mxu0 0.0
          %1008 = vmatpush1.msra.mxu0 0.0
          %1009 = vmatprep.subr.mxu0 0.0
          %1010 = vmatpush1.msra.mxu0 0.0
          %1011 = vmatprep.subr.mxu0 0.0
          %1012 = vmatpush1.msra.mxu0 0.0
          %1013 = vmatprep.subr.mxu0 0.0
          %1014 = vmatpush1.msra.mxu0 0.0
          %1015 = vmatprep.subr.mxu0 0.0
          %1016 = vmatpush1.msra.mxu0 0.0
          %1017 = vmatprep.subr.mxu0 0.0
          %1018 = vmatpush1.msra.mxu0 0.0
          %1019 = vmatprep.subr.mxu0 0.0
          %1020 = vmatpush1.msra.mxu0 0.0
          %1021 = vmatprep.subr.mxu0 0.0
          %1022 = vmatpush1.msra.mxu0 0.0
          %1023 = vmatprep.subr.mxu0 0.0
          %1024 = vmatpush1.msra.mxu0 0.0
          %1025 = vmatprep.subr.mxu0 0.0
          %1026 = vmatpush1.msra.mxu0 %v990
          %1027 = vmatprep.subr.mxu0 0.0
          %1028 = vmatpush2.msra.mxu0 0.0
          %1029 = vmatprep.subr.mxu0 0.0
          %1030 = vmatpush2.msra.mxu0 0.0
          %1031 = vmatprep.subr.mxu0 0.0
          %1032 = vmatpush2.msra.mxu0 0.0
          %1033 = vmatprep.subr.mxu0 0.0
          %1034 = vmatpush2.msra.mxu0 0.0
          %1035 = vmatprep.subr.mxu0 0.0
          %1036 = vmatpush2.msra.mxu0 0.0
          %1037 = vmatprep.subr.mxu0 0.0
          %1038 = vmatpush2.msra.mxu0 0.0
          %1039 = vmatprep.subr.mxu0 0.0
          %1040 = vmatpush2.msra.mxu0 0.0
          %1041 = vmatprep.subr.mxu0 0.0
          %1042 = vmatpush2.msra.mxu0 0.0
          %1043 = vmatprep.subr.mxu0 0.0
          %1044 = vmatpush2.msra.mxu0 0.0
          %1045 = vmatprep.subr.mxu0 0.0
          %1046 = vmatpush2.msra.mxu0 0.0
          %1047 = vmatprep.subr.mxu0 0.0
          %1048 = vmatpush2.msra.mxu0 0.0
          %1049 = vmatprep.subr.mxu0 0.0
          %1050 = vmatpush2.msra.mxu0 0.0
          %1051 = vmatprep.subr.mxu0 0.0
          %1052 = vmatpush2.msra.mxu0 0.0
          %1053 = vmatprep.subr.mxu0 0.0
          %1054 = vmatpush2.msra.mxu0 0.0
          %1055 = vmatprep.subr.mxu0 0.0
          %1056 = vmatpush2.msra.mxu0 0.0
          %1057 = vmatprep.subr.mxu0 0.0
          %1058 = vmatpush2.msra.mxu0 0.0
          %1059 = vmatprep.mubr.f32.mxu0 0.0
          %1060 = vmatmul.mubr.f32.gmra.mxu0 %v993
          %v1061 = vpop.f32.mrf.mxu0
          %v1062 = vadd.f32 0.0, %v1061
          %v1063 = vpop.f32.mrf.mxu0
          %1064 = vdwg.mxu0
          %1066 = vrot.lane.b32.xlu0 %v1062, 16
          %v1067 = vpop.permute.xlu0 %1066
          %v1069 = vadd.f32 %v988, %v1067
          %vm1070 = vcmask 195712
          %1071 = vst.msk [vmem:[#allocation6] sm:$0xff] %vm1070, %v1069
          %1072 = vst.msk [vmem:[#allocation4] sm:$0xff] %vm980, %v962
          %1073 = vrot.lane.b32.xlu0 %v486, 104
          %v1074 = vpop.permute.xlu0 %1073
          %1075 = vrot.lane.b32.xlu0 %v499, 104
          %v1076 = vpop.permute.xlu0 %1075
          %v1077 = vsel %vm502, %v1074, 0
          %v1079 = vsel %vm502, %v1076, 0
          %1081 = vmatprep.subr.mxu0 0.0
          %1082 = vmatpush1.xpose.msra.mxu0 0.0
          %1083 = vmatprep.subr.mxu0 0.0
          %1084 = vmatpush1.xpose.msra.mxu0 0.0
          %1085 = vmatprep.subr.mxu0 0.0
          %1086 = vmatpush1.xpose.msra.mxu0 0.0
          %1087 = vmatprep.subr.mxu0 0.0
          %1088 = vmatpush1.xpose.msra.mxu0 0.0
          %1089 = vmatprep.subr.mxu0 0.0
          %1090 = vmatpush1.xpose.msra.mxu0 0.0
          %1091 = vmatprep.subr.mxu0 0.0
          %1092 = vmatpush1.xpose.msra.mxu0 0.0
          %1093 = vmatprep.subr.mxu0 0.0
          %1094 = vmatpush1.xpose.msra.mxu0 0.0
          %1095 = vmatprep.subr.mxu0 0.0
          %1096 = vmatpush1.xpose.msra.mxu0 0.0
          %1097 = vmatprep.subr.mxu0 0.0
          %1098 = vmatpush1.xpose.msra.mxu0 0.0
          %1099 = vmatprep.subr.mxu0 0.0
          %1100 = vmatpush1.xpose.msra.mxu0 0.0
          %1101 = vmatprep.subr.mxu0 0.0
          %1102 = vmatpush1.xpose.msra.mxu0 0.0
          %1103 = vmatprep.subr.mxu0 0.0
          %1104 = vmatpush1.xpose.msra.mxu0 0.0
          %1105 = vmatprep.subr.mxu0 0.0
          %1106 = vmatpush1.xpose.msra.mxu0 0.0
          %1107 = vmatprep.subr.mxu0 0.0
          %1108 = vmatpush1.xpose.msra.mxu0 0.0
          %1109 = vmatprep.subr.mxu0 0.0
          %1110 = vmatpush1.xpose.msra.mxu0 0.0
          %1111 = vmatprep.subr.mxu0 0.0
          %1112 = vmatpush1.xpose.msra.mxu0 %v1079
          %1113 = vmatprep.subr.mxu0 0.0
          %1114 = vmatpush2.xpose.msra.mxu0 0.0
          %1115 = vmatprep.subr.mxu0 0.0
          %1116 = vmatpush2.xpose.msra.mxu0 0.0
          %1117 = vmatprep.subr.mxu0 0.0
          %1118 = vmatpush2.xpose.msra.mxu0 0.0
          %1119 = vmatprep.subr.mxu0 0.0
          %1120 = vmatpush2.xpose.msra.mxu0 0.0
          %1121 = vmatprep.subr.mxu0 0.0
          %1122 = vmatpush2.xpose.msra.mxu0 0.0
          %1123 = vmatprep.subr.mxu0 0.0
          %1124 = vmatpush2.xpose.msra.mxu0 0.0
          %1125 = vmatprep.subr.mxu0 0.0
          %1126 = vmatpush2.xpose.msra.mxu0 0.0
          %1127 = vmatprep.subr.mxu0 0.0
          %1128 = vmatpush2.xpose.msra.mxu0 0.0
          %1129 = vmatprep.subr.mxu0 0.0
          %1130 = vmatpush2.xpose.msra.mxu0 0.0
          %1131 = vmatprep.subr.mxu0 0.0
          %1132 = vmatpush2.xpose.msra.mxu0 0.0
          %1133 = vmatprep.subr.mxu0 0.0
          %1134 = vmatpush2.xpose.msra.mxu0 0.0
          %1135 = vmatprep.subr.mxu0 0.0
          %1136 = vmatpush2.xpose.msra.mxu0 0.0
          %1137 = vmatprep.subr.mxu0 0.0
          %1138 = vmatpush2.xpose.msra.mxu0 0.0
          %1139 = vmatprep.subr.mxu0 0.0
          %1140 = vmatpush2.xpose.msra.mxu0 0.0
          %1141 = vmatprep.subr.mxu0 0.0
          %1142 = vmatpush2.xpose.msra.mxu0 0.0
          %1143 = vmatprep.subr.mxu0 0.0
          %1144 = vmatpush2.xpose.msra.mxu0 0.0
          %1145 = vmatprep.mubr.f32.mxu0 0.0
          %1146 = vmatmul.mubr.f32.gmra.mxu0 %v1077
          %v1147 = vpop.f32.mrf.mxu0
          %v1148 = vadd.f32 0.0, %v1147
          %v1149 = vpop.f32.mrf.mxu0
          %1150 = vdwg.mxu0
          %v1151 = vld [vmem:[#allocation4] sm:$0xff]
          %v1152 = vsel %vm502, %v1148, -inf
          %1153 = vmax.xlane.f32.xlu0 %v1152
          %v1154 = vpop.xlane.xlu0 %1153
          %v1155 = vmax.f32 %v1151, %v1154
          %v1156 = vsub.f32 %v1151, %v1155
          %v1157 = vmul.f32 %v1156, 1.442695
          %v1158 = vpow.pop %v1157
          %1160 = vset.pattern.permute.xlu0 3
          %1161 = vperm.xlu0 %1160, %v1155
          %v1162 = vpop.permute.xlu0 %1161
          %v1164 = vsub.f32 %v1148, %v1162
          %v1165 = vmul.f32 %v1164, 1.442695
          %v1166 = vpow.pop %v1165
          %v1167 = vld [vmem:[#allocation5] sm:$0xff]
          %v1168 = vmul.f32 %v1158, %v1167
          %v1169 = vsel %vm502, %v1166, 0.0
          %1170 = vadd.xlane.f32.xlu0 %v1169
          %v1171 = vpop.xlane.xlu0 %1170
          %v1172 = vadd.f32 %v1168, %v1171
          %vm1173 = vcmask 31768
          %1174 = vst.msk [vmem:[#allocation5] sm:$0xff] %vm1173, %v1172
          %v1175 = vld [vmem:[#allocation6] sm:$0xff]
          %1177 = vset.pattern.permute.xlu0 3
          %1178 = vperm.xlu0 %1177, %v1158
          %v1179 = vpop.permute.xlu0 %1178
          %v1181 = vmul.f32 %v1179, %v1175
          %1182 = vrot.lane.b32.xlu0 %v501, 104
          %v1183 = vpop.permute.xlu0 %1182
          %v1186 = vsel %vm502, %v1166, 0
          %1188 = vmatprep.subr.mxu0 0.0
          %1189 = vmatpush1.msra.mxu0 0.0
          %1190 = vmatprep.subr.mxu0 0.0
          %1191 = vmatpush1.msra.mxu0 0.0
          %1192 = vmatprep.subr.mxu0 0.0
          %1193 = vmatpush1.msra.mxu0 0.0
          %1194 = vmatprep.subr.mxu0 0.0
          %1195 = vmatpush1.msra.mxu0 0.0
          %1196 = vmatprep.subr.mxu0 0.0
          %1197 = vmatpush1.msra.mxu0 0.0
          %1198 = vmatprep.subr.mxu0 0.0
          %1199 = vmatpush1.msra.mxu0 0.0
          %1200 = vmatprep.subr.mxu0 0.0
          %1201 = vmatpush1.msra.mxu0 0.0
          %1202 = vmatprep.subr.mxu0 0.0
          %1203 = vmatpush1.msra.mxu0 0.0
          %1204 = vmatprep.subr.mxu0 0.0
          %1205 = vmatpush1.msra.mxu0 0.0
          %1206 = vmatprep.subr.mxu0 0.0
          %1207 = vmatpush1.msra.mxu0 0.0
          %1208 = vmatprep.subr.mxu0 0.0
          %1209 = vmatpush1.msra.mxu0 0.0
          %1210 = vmatprep.subr.mxu0 0.0
          %1211 = vmatpush1.msra.mxu0 0.0
          %1212 = vmatprep.subr.mxu0 0.0
          %1213 = vmatpush1.msra.mxu0 0.0
          %1214 = vmatprep.subr.mxu0 0.0
          %1215 = vmatpush1.msra.mxu0 0.0
          %1216 = vmatprep.subr.mxu0 0.0
          %1217 = vmatpush1.msra.mxu0 0.0
          %1218 = vmatprep.subr.mxu0 0.0
          %1219 = vmatpush1.msra.mxu0 %v1183
          %1220 = vmatprep.subr.mxu0 0.0
          %1221 = vmatpush2.msra.mxu0 0.0
          %1222 = vmatprep.subr.mxu0 0.0
          %1223 = vmatpush2.msra.mxu0 0.0
          %1224 = vmatprep.subr.mxu0 0.0
          %1225 = vmatpush2.msra.mxu0 0.0
          %1226 = vmatprep.subr.mxu0 0.0
          %1227 = vmatpush2.msra.mxu0 0.0
          %1228 = vmatprep.subr.mxu0 0.0
          %1229 = vmatpush2.msra.mxu0 0.0
          %1230 = vmatprep.subr.mxu0 0.0
          %1231 = vmatpush2.msra.mxu0 0.0
          %1232 = vmatprep.subr.mxu0 0.0
          %1233 = vmatpush2.msra.mxu0 0.0
          %1234 = vmatprep.subr.mxu0 0.0
          %1235 = vmatpush2.msra.mxu0 0.0
          %1236 = vmatprep.subr.mxu0 0.0
          %1237 = vmatpush2.msra.mxu0 0.0
          %1238 = vmatprep.subr.mxu0 0.0
          %1239 = vmatpush2.msra.mxu0 0.0
          %1240 = vmatprep.subr.mxu0 0.0
          %1241 = vmatpush2.msra.mxu0 0.0
          %1242 = vmatprep.subr.mxu0 0.0
          %1243 = vmatpush2.msra.mxu0 0.0
          %1244 = vmatprep.subr.mxu0 0.0
          %1245 = vmatpush2.msra.mxu0 0.0
          %1246 = vmatprep.subr.mxu0 0.0
          %1247 = vmatpush2.msra.mxu0 0.0
          %1248 = vmatprep.subr.mxu0 0.0
          %1249 = vmatpush2.msra.mxu0 0.0
          %1250 = vmatprep.subr.mxu0 0.0
          %1251 = vmatpush2.msra.mxu0 0.0
          %1252 = vmatprep.mubr.f32.mxu0 0.0
          %1253 = vmatmul.mubr.f32.gmra.mxu0 %v1186
          %v1254 = vpop.f32.mrf.mxu0
          %v1255 = vadd.f32 0.0, %v1254
          %v1256 = vpop.f32.mrf.mxu0
          %1257 = vdwg.mxu0
          %1259 = vrot.lane.b32.xlu0 %v1255, 24
          %v1260 = vpop.permute.xlu0 %1259
          %v1262 = vadd.f32 %v1181, %v1260
          %vm1263 = vcmask 261312
          %1264 = vst.msk [vmem:[#allocation6] sm:$0xff] %vm1263, %v1262
          %1265 = vst.msk [vmem:[#allocation4] sm:$0xff] %vm1173, %v1155
        $region65: #{tpu_custom_call.1} parent=39 // loop_footer
          %s494 = sadd.s32 %s492, 1
        $region66: #{tpu_custom_call.1} parent=39 // loop_footer_branch
          %491 = sbr.rel target = $region62
        $region67: #{tpu_custom_call.1} parent=39 // loop_exit
          _
        %s1266 = scalar_lea.vmem [#allocation2], %s405
        %v1267 = vld [vmem:[%s1266] sm:$0xff]
        %s1268 = scalar_lea.vmem [#allocation3], %s405
        %v1269 = vld [vmem:[%s1268] sm:$0xff]
        %v1270 = vlaneseq
        %v1271 = vshrl.u32 %v1270, 7
        %v1272 = vstv %s405
        %v1273 = vadd.s32 %v1272, %v1271
        %v1274 = vlaneseq
        %v1275 = vand.u32 %v1274, 127
        %v1276 = vstv %s405
        %v1277 = vadd.s32 %v1276, %v1275
        %vm1278 = vcmp.le.s32.totalorder %v1277, %v1273
        %vm1279 = vcmask 64512
        %v1281 = vsel %vm1279, %v486, 0
        %v1284 = vsel %vm1279, %v1267, 0
        %1286 = vmatprep.subr.mxu0 0.0
        %1287 = vmatpush1.xpose.msra.mxu0 0.0
        %1288 = vmatprep.subr.mxu0 0.0
        %1289 = vmatpush1.xpose.msra.mxu0 0.0
        %1290 = vmatprep.subr.mxu0 0.0
        %1291 = vmatpush1.xpose.msra.mxu0 0.0
        %1292 = vmatprep.subr.mxu0 0.0
        %1293 = vmatpush1.xpose.msra.mxu0 0.0
        %1294 = vmatprep.subr.mxu0 0.0
        %1295 = vmatpush1.xpose.msra.mxu0 0.0
        %1296 = vmatprep.subr.mxu0 0.0
        %1297 = vmatpush1.xpose.msra.mxu0 0.0
        %1298 = vmatprep.subr.mxu0 0.0
        %1299 = vmatpush1.xpose.msra.mxu0 0.0
        %1300 = vmatprep.subr.mxu0 0.0
        %1301 = vmatpush1.xpose.msra.mxu0 0.0
        %1302 = vmatprep.subr.mxu0 0.0
        %1303 = vmatpush1.xpose.msra.mxu0 0.0
        %1304 = vmatprep.subr.mxu0 0.0
        %1305 = vmatpush1.xpose.msra.mxu0 0.0
        %1306 = vmatprep.subr.mxu0 0.0
        %1307 = vmatpush1.xpose.msra.mxu0 0.0
        %1308 = vmatprep.subr.mxu0 0.0
        %1309 = vmatpush1.xpose.msra.mxu0 0.0
        %1310 = vmatprep.subr.mxu0 0.0
        %1311 = vmatpush1.xpose.msra.mxu0 0.0
        %1312 = vmatprep.subr.mxu0 0.0
        %1313 = vmatpush1.xpose.msra.mxu0 0.0
        %1314 = vmatprep.subr.mxu0 0.0
        %1315 = vmatpush1.xpose.msra.mxu0 0.0
        %1316 = vmatprep.subr.mxu0 0.0
        %1317 = vmatpush1.xpose.msra.mxu0 %v1284
        %1318 = vmatprep.subr.mxu0 0.0
        %1319 = vmatpush2.xpose.msra.mxu0 0.0
        %1320 = vmatprep.subr.mxu0 0.0
        %1321 = vmatpush2.xpose.msra.mxu0 0.0
        %1322 = vmatprep.subr.mxu0 0.0
        %1323 = vmatpush2.xpose.msra.mxu0 0.0
        %1324 = vmatprep.subr.mxu0 0.0
        %1325 = vmatpush2.xpose.msra.mxu0 0.0
        %1326 = vmatprep.subr.mxu0 0.0
        %1327 = vmatpush2.xpose.msra.mxu0 0.0
        %1328 = vmatprep.subr.mxu0 0.0
        %1329 = vmatpush2.xpose.msra.mxu0 0.0
        %1330 = vmatprep.subr.mxu0 0.0
        %1331 = vmatpush2.xpose.msra.mxu0 0.0
        %1332 = vmatprep.subr.mxu0 0.0
        %1333 = vmatpush2.xpose.msra.mxu0 0.0
        %1334 = vmatprep.subr.mxu0 0.0
        %1335 = vmatpush2.xpose.msra.mxu0 0.0
        %1336 = vmatprep.subr.mxu0 0.0
        %1337 = vmatpush2.xpose.msra.mxu0 0.0
        %1338 = vmatprep.subr.mxu0 0.0
        %1339 = vmatpush2.xpose.msra.mxu0 0.0
        %1340 = vmatprep.subr.mxu0 0.0
        %1341 = vmatpush2.xpose.msra.mxu0 0.0
        %1342 = vmatprep.subr.mxu0 0.0
        %1343 = vmatpush2.xpose.msra.mxu0 0.0
        %1344 = vmatprep.subr.mxu0 0.0
        %1345 = vmatpush2.xpose.msra.mxu0 0.0
        %1346 = vmatprep.subr.mxu0 0.0
        %1347 = vmatpush2.xpose.msra.mxu0 0.0
        %1348 = vmatprep.subr.mxu0 0.0
        %1349 = vmatpush2.xpose.msra.mxu0 0.0
        %1350 = vmatprep.mubr.f32.mxu0 0.0
        %1351 = vmatmul.mubr.f32.gmra.mxu0 %v1281
        %v1352 = vpop.f32.mrf.mxu0
        %v1353 = vadd.f32 0.0, %v1352
        %v1354 = vpop.f32.mrf.mxu0
        %1355 = vdwg.mxu0
        %v1356 = vsel %vm1278, %v1353, -inf
        %v1357 = vld [vmem:[#allocation4] sm:$0xff]
        %v1358 = vsel %vm1279, %v1356, -inf
        %1359 = vmax.xlane.f32.xlu0 %v1358
        %v1360 = vpop.xlane.xlu0 %1359
        %v1361 = vmax.f32 %v1357, %v1360
        %v1362 = vsub.f32 %v1357, %v1361
        %v1363 = vmul.f32 %v1362, 1.442695
        %v1364 = vpow.pop %v1363
        %1366 = vset.pattern.permute.xlu0 0
        %1367 = vperm.xlu0 %1366, %v1361
        %v1368 = vpop.permute.xlu0 %1367
        %v1370 = vsub.f32 %v1356, %v1368
        %v1371 = vmul.f32 %v1370, 1.442695
        %v1372 = vpow.pop %v1371
        %v1373 = vld [vmem:[#allocation5] sm:$0xff]
        %v1374 = vmul.f32 %v1364, %v1373
        %v1375 = vsel %vm1279, %v1372, 0.0
        %1376 = vadd.xlane.f32.xlu0 %v1375
        %v1377 = vpop.xlane.xlu0 %1376
        %v1378 = vadd.f32 %v1374, %v1377
        %vm1379 = vcmask 7168
        %1380 = vst.msk [vmem:[#allocation5] sm:$0xff] %vm1379, %v1378
        %v1381 = vld [vmem:[#allocation6] sm:$0xff]
        %1383 = vset.pattern.permute.xlu0 0
        %1384 = vperm.xlu0 %1383, %v1364
        %v1385 = vpop.permute.xlu0 %1384
        %v1387 = vmul.f32 %v1385, %v1381
        %v1389 = vsel %vm1279, %v1372, 0
        %1391 = vmatprep.subr.mxu0 0.0
        %1392 = vmatpush1.msra.mxu0 0.0
        %1393 = vmatprep.subr.mxu0 0.0
        %1394 = vmatpush1.msra.mxu0 0.0
        %1395 = vmatprep.subr.mxu0 0.0
        %1396 = vmatpush1.msra.mxu0 0.0
        %1397 = vmatprep.subr.mxu0 0.0
        %1398 = vmatpush1.msra.mxu0 0.0
        %1399 = vmatprep.subr.mxu0 0.0
        %1400 = vmatpush1.msra.mxu0 0.0
        %1401 = vmatprep.subr.mxu0 0.0
        %1402 = vmatpush1.msra.mxu0 0.0
        %1403 = vmatprep.subr.mxu0 0.0
        %1404 = vmatpush1.msra.mxu0 0.0
        %1405 = vmatprep.subr.mxu0 0.0
        %1406 = vmatpush1.msra.mxu0 0.0
        %1407 = vmatprep.subr.mxu0 0.0
        %1408 = vmatpush1.msra.mxu0 0.0
        %1409 = vmatprep.subr.mxu0 0.0
        %1410 = vmatpush1.msra.mxu0 0.0
        %1411 = vmatprep.subr.mxu0 0.0
        %1412 = vmatpush1.msra.mxu0 0.0
        %1413 = vmatprep.subr.mxu0 0.0
        %1414 = vmatpush1.msra.mxu0 0.0
        %1415 = vmatprep.subr.mxu0 0.0
        %1416 = vmatpush1.msra.mxu0 0.0
        %1417 = vmatprep.subr.mxu0 0.0
        %1418 = vmatpush1.msra.mxu0 0.0
        %1419 = vmatprep.subr.mxu0 0.0
        %1420 = vmatpush1.msra.mxu0 0.0
        %1421 = vmatprep.subr.mxu0 0.0
        %1422 = vmatpush1.msra.mxu0 %v1269
        %1423 = vmatprep.subr.mxu0 0.0
        %1424 = vmatpush2.msra.mxu0 0.0
        %1425 = vmatprep.subr.mxu0 0.0
        %1426 = vmatpush2.msra.mxu0 0.0
        %1427 = vmatprep.subr.mxu0 0.0
        %1428 = vmatpush2.msra.mxu0 0.0
        %1429 = vmatprep.subr.mxu0 0.0
        %1430 = vmatpush2.msra.mxu0 0.0
        %1431 = vmatprep.subr.mxu0 0.0
        %1432 = vmatpush2.msra.mxu0 0.0
        %1433 = vmatprep.subr.mxu0 0.0
        %1434 = vmatpush2.msra.mxu0 0.0
        %1435 = vmatprep.subr.mxu0 0.0
        %1436 = vmatpush2.msra.mxu0 0.0
        %1437 = vmatprep.subr.mxu0 0.0
        %1438 = vmatpush2.msra.mxu0 0.0
        %1439 = vmatprep.subr.mxu0 0.0
        %1440 = vmatpush2.msra.mxu0 0.0
        %1441 = vmatprep.subr.mxu0 0.0
        %1442 = vmatpush2.msra.mxu0 0.0
        %1443 = vmatprep.subr.mxu0 0.0
        %1444 = vmatpush2.msra.mxu0 0.0
        %1445 = vmatprep.subr.mxu0 0.0
        %1446 = vmatpush2.msra.mxu0 0.0
        %1447 = vmatprep.subr.mxu0 0.0
        %1448 = vmatpush2.msra.mxu0 0.0
        %1449 = vmatprep.subr.mxu0 0.0
        %1450 = vmatpush2.msra.mxu0 0.0
        %1451 = vmatprep.subr.mxu0 0.0
        %1452 = vmatpush2.msra.mxu0 0.0
        %1453 = vmatprep.subr.mxu0 0.0
        %1454 = vmatpush2.msra.mxu0 0.0
        %1455 = vmatprep.mubr.f32.mxu0 0.0
        %1456 = vmatmul.mubr.f32.gmra.mxu0 %v1389
        %v1457 = vpop.f32.mrf.mxu0
        %v1458 = vadd.f32 0.0, %v1457
        %v1459 = vpop.f32.mrf.mxu0
        %1460 = vdwg.mxu0
        %v1461 = vadd.f32 %v1387, %v1458
        %1462 = vst.msk [vmem:[#allocation6] sm:$0xff] %vm1279, %v1461
        %1463 = vst.msk [vmem:[#allocation4] sm:$0xff] %vm1379, %v1361
        %1464 = vrot.lane.b32.xlu0 %v486, 120
        %v1465 = vpop.permute.xlu0 %1464
        %1466 = vrot.lane.b32.xlu0 %v1267, 120
        %v1467 = vpop.permute.xlu0 %1466
        %v1468 = vsel %vm1279, %v1465, 0
        %v1470 = vsel %vm1279, %v1467, 0
        %1472 = vmatprep.subr.mxu0 0.0
        %1473 = vmatpush1.xpose.msra.mxu0 0.0
        %1474 = vmatprep.subr.mxu0 0.0
        %1475 = vmatpush1.xpose.msra.mxu0 0.0
        %1476 = vmatprep.subr.mxu0 0.0
        %1477 = vmatpush1.xpose.msra.mxu0 0.0
        %1478 = vmatprep.subr.mxu0 0.0
        %1479 = vmatpush1.xpose.msra.mxu0 0.0
        %1480 = vmatprep.subr.mxu0 0.0
        %1481 = vmatpush1.xpose.msra.mxu0 0.0
        %1482 = vmatprep.subr.mxu0 0.0
        %1483 = vmatpush1.xpose.msra.mxu0 0.0
        %1484 = vmatprep.subr.mxu0 0.0
        %1485 = vmatpush1.xpose.msra.mxu0 0.0
        %1486 = vmatprep.subr.mxu0 0.0
        %1487 = vmatpush1.xpose.msra.mxu0 0.0
        %1488 = vmatprep.subr.mxu0 0.0
        %1489 = vmatpush1.xpose.msra.mxu0 0.0
        %1490 = vmatprep.subr.mxu0 0.0
        %1491 = vmatpush1.xpose.msra.mxu0 0.0
        %1492 = vmatprep.subr.mxu0 0.0
        %1493 = vmatpush1.xpose.msra.mxu0 0.0
        %1494 = vmatprep.subr.mxu0 0.0
        %1495 = vmatpush1.xpose.msra.mxu0 0.0
        %1496 = vmatprep.subr.mxu0 0.0
        %1497 = vmatpush1.xpose.msra.mxu0 0.0
        %1498 = vmatprep.subr.mxu0 0.0
        %1499 = vmatpush1.xpose.msra.mxu0 0.0
        %1500 = vmatprep.subr.mxu0 0.0
        %1501 = vmatpush1.xpose.msra.mxu0 0.0
        %1502 = vmatprep.subr.mxu0 0.0
        %1503 = vmatpush1.xpose.msra.mxu0 %v1470
        %1504 = vmatprep.subr.mxu0 0.0
        %1505 = vmatpush2.xpose.msra.mxu0 0.0
        %1506 = vmatprep.subr.mxu0 0.0
        %1507 = vmatpush2.xpose.msra.mxu0 0.0
        %1508 = vmatprep.subr.mxu0 0.0
        %1509 = vmatpush2.xpose.msra.mxu0 0.0
        %1510 = vmatprep.subr.mxu0 0.0
        %1511 = vmatpush2.xpose.msra.mxu0 0.0
        %1512 = vmatprep.subr.mxu0 0.0
        %1513 = vmatpush2.xpose.msra.mxu0 0.0
        %1514 = vmatprep.subr.mxu0 0.0
        %1515 = vmatpush2.xpose.msra.mxu0 0.0
        %1516 = vmatprep.subr.mxu0 0.0
        %1517 = vmatpush2.xpose.msra.mxu0 0.0
        %1518 = vmatprep.subr.mxu0 0.0
        %1519 = vmatpush2.xpose.msra.mxu0 0.0
        %1520 = vmatprep.subr.mxu0 0.0
        %1521 = vmatpush2.xpose.msra.mxu0 0.0
        %1522 = vmatprep.subr.mxu0 0.0
        %1523 = vmatpush2.xpose.msra.mxu0 0.0
        %1524 = vmatprep.subr.mxu0 0.0
        %1525 = vmatpush2.xpose.msra.mxu0 0.0
        %1526 = vmatprep.subr.mxu0 0.0
        %1527 = vmatpush2.xpose.msra.mxu0 0.0
        %1528 = vmatprep.subr.mxu0 0.0
        %1529 = vmatpush2.xpose.msra.mxu0 0.0
        %1530 = vmatprep.subr.mxu0 0.0
        %1531 = vmatpush2.xpose.msra.mxu0 0.0
        %1532 = vmatprep.subr.mxu0 0.0
        %1533 = vmatpush2.xpose.msra.mxu0 0.0
        %1534 = vmatprep.subr.mxu0 0.0
        %1535 = vmatpush2.xpose.msra.mxu0 0.0
        %1536 = vmatprep.mubr.f32.mxu0 0.0
        %1537 = vmatmul.mubr.f32.gmra.mxu0 %v1468
        %v1538 = vpop.f32.mrf.mxu0
        %v1539 = vadd.f32 0.0, %v1538
        %v1540 = vpop.f32.mrf.mxu0
        %1541 = vdwg.mxu0
        %v1542 = vsel %vm1278, %v1539, -inf
        %v1543 = vld [vmem:[#allocation4] sm:$0xff]
        %v1544 = vsel %vm1279, %v1542, -inf
        %1545 = vmax.xlane.f32.xlu0 %v1544
        %v1546 = vpop.xlane.xlu0 %1545
        %v1547 = vmax.f32 %v1543, %v1546
        %v1548 = vsub.f32 %v1543, %v1547
        %v1549 = vmul.f32 %v1548, 1.442695
        %v1550 = vpow.pop %v1549
        %1552 = vset.pattern.permute.xlu0 1
        %1553 = vperm.xlu0 %1552, %v1547
        %v1554 = vpop.permute.xlu0 %1553
        %v1556 = vsub.f32 %v1542, %v1554
        %v1557 = vmul.f32 %v1556, 1.442695
        %v1558 = vpow.pop %v1557
        %v1559 = vld [vmem:[#allocation5] sm:$0xff]
        %v1560 = vmul.f32 %v1550, %v1559
        %v1561 = vsel %vm1279, %v1558, 0.0
        %1562 = vadd.xlane.f32.xlu0 %v1561
        %v1563 = vpop.xlane.xlu0 %1562
        %v1564 = vadd.f32 %v1560, %v1563
        %vm1565 = vcmask 15368
        %1566 = vst.msk [vmem:[#allocation5] sm:$0xff] %vm1565, %v1564
        %v1567 = vld [vmem:[#allocation6] sm:$0xff]
        %1569 = vset.pattern.permute.xlu0 1
        %1570 = vperm.xlu0 %1569, %v1550
        %v1571 = vpop.permute.xlu0 %1570
        %v1573 = vmul.f32 %v1571, %v1567
        %1575 = vrot.lane.b32.xlu0 %v1269, 120
        %v1576 = vpop.permute.xlu0 %1575
        %v1579 = vsel %vm1279, %v1558, 0
        %1581 = vmatprep.subr.mxu0 0.0
        %1582 = vmatpush1.msra.mxu0 0.0
        %1583 = vmatprep.subr.mxu0 0.0
        %1584 = vmatpush1.msra.mxu0 0.0
        %1585 = vmatprep.subr.mxu0 0.0
        %1586 = vmatpush1.msra.mxu0 0.0
        %1587 = vmatprep.subr.mxu0 0.0
        %1588 = vmatpush1.msra.mxu0 0.0
        %1589 = vmatprep.subr.mxu0 0.0
        %1590 = vmatpush1.msra.mxu0 0.0
        %1591 = vmatprep.subr.mxu0 0.0
        %1592 = vmatpush1.msra.mxu0 0.0
        %1593 = vmatprep.subr.mxu0 0.0
        %1594 = vmatpush1.msra.mxu0 0.0
        %1595 = vmatprep.subr.mxu0 0.0
        %1596 = vmatpush1.msra.mxu0 0.0
        %1597 = vmatprep.subr.mxu0 0.0
        %1598 = vmatpush1.msra.mxu0 0.0
        %1599 = vmatprep.subr.mxu0 0.0
        %1600 = vmatpush1.msra.mxu0 0.0
        %1601 = vmatprep.subr.mxu0 0.0
        %1602 = vmatpush1.msra.mxu0 0.0
        %1603 = vmatprep.subr.mxu0 0.0
        %1604 = vmatpush1.msra.mxu0 0.0
        %1605 = vmatprep.subr.mxu0 0.0
        %1606 = vmatpush1.msra.mxu0 0.0
        %1607 = vmatprep.subr.mxu0 0.0
        %1608 = vmatpush1.msra.mxu0 0.0
        %1609 = vmatprep.subr.mxu0 0.0
        %1610 = vmatpush1.msra.mxu0 0.0
        %1611 = vmatprep.subr.mxu0 0.0
        %1612 = vmatpush1.msra.mxu0 %v1576
        %1613 = vmatprep.subr.mxu0 0.0
        %1614 = vmatpush2.msra.mxu0 0.0
        %1615 = vmatprep.subr.mxu0 0.0
        %1616 = vmatpush2.msra.mxu0 0.0
        %1617 = vmatprep.subr.mxu0 0.0
        %1618 = vmatpush2.msra.mxu0 0.0
        %1619 = vmatprep.subr.mxu0 0.0
        %1620 = vmatpush2.msra.mxu0 0.0
        %1621 = vmatprep.subr.mxu0 0.0
        %1622 = vmatpush2.msra.mxu0 0.0
        %1623 = vmatprep.subr.mxu0 0.0
        %1624 = vmatpush2.msra.mxu0 0.0
        %1625 = vmatprep.subr.mxu0 0.0
        %1626 = vmatpush2.msra.mxu0 0.0
        %1627 = vmatprep.subr.mxu0 0.0
        %1628 = vmatpush2.msra.mxu0 0.0
        %1629 = vmatprep.subr.mxu0 0.0
        %1630 = vmatpush2.msra.mxu0 0.0
        %1631 = vmatprep.subr.mxu0 0.0
        %1632 = vmatpush2.msra.mxu0 0.0
        %1633 = vmatprep.subr.mxu0 0.0
        %1634 = vmatpush2.msra.mxu0 0.0
        %1635 = vmatprep.subr.mxu0 0.0
        %1636 = vmatpush2.msra.mxu0 0.0
        %1637 = vmatprep.subr.mxu0 0.0
        %1638 = vmatpush2.msra.mxu0 0.0
        %1639 = vmatprep.subr.mxu0 0.0
        %1640 = vmatpush2.msra.mxu0 0.0
        %1641 = vmatprep.subr.mxu0 0.0
        %1642 = vmatpush2.msra.mxu0 0.0
        %1643 = vmatprep.subr.mxu0 0.0
        %1644 = vmatpush2.msra.mxu0 0.0
        %1645 = vmatprep.mubr.f32.mxu0 0.0
        %1646 = vmatmul.mubr.f32.gmra.mxu0 %v1579
        %v1647 = vpop.f32.mrf.mxu0
        %v1648 = vadd.f32 0.0, %v1647
        %v1649 = vpop.f32.mrf.mxu0
        %1650 = vdwg.mxu0
        %1652 = vrot.lane.b32.xlu0 %v1648, 8
        %v1653 = vpop.permute.xlu0 %1652
        %v1655 = vadd.f32 %v1573, %v1653
        %vm1656 = vcmask 130112
        %1657 = vst.msk [vmem:[#allocation6] sm:$0xff] %vm1656, %v1655
        %1658 = vst.msk [vmem:[#allocation4] sm:$0xff] %vm1565, %v1547
        %1659 = vrot.lane.b32.xlu0 %v486, 112
        %v1660 = vpop.permute.xlu0 %1659
        %1661 = vrot.lane.b32.xlu0 %v1267, 112
        %v1662 = vpop.permute.xlu0 %1661
        %v1663 = vsel %vm1279, %v1660, 0
        %v1665 = vsel %vm1279, %v1662, 0
        %1667 = vmatprep.subr.mxu0 0.0
        %1668 = vmatpush1.xpose.msra.mxu0 0.0
        %1669 = vmatprep.subr.mxu0 0.0
        %1670 = vmatpush1.xpose.msra.mxu0 0.0
        %1671 = vmatprep.subr.mxu0 0.0
        %1672 = vmatpush1.xpose.msra.mxu0 0.0
        %1673 = vmatprep.subr.mxu0 0.0
        %1674 = vmatpush1.xpose.msra.mxu0 0.0
        %1675 = vmatprep.subr.mxu0 0.0
        %1676 = vmatpush1.xpose.msra.mxu0 0.0
        %1677 = vmatprep.subr.mxu0 0.0
        %1678 = vmatpush1.xpose.msra.mxu0 0.0
        %1679 = vmatprep.subr.mxu0 0.0
        %1680 = vmatpush1.xpose.msra.mxu0 0.0
        %1681 = vmatprep.subr.mxu0 0.0
        %1682 = vmatpush1.xpose.msra.mxu0 0.0
        %1683 = vmatprep.subr.mxu0 0.0
        %1684 = vmatpush1.xpose.msra.mxu0 0.0
        %1685 = vmatprep.subr.mxu0 0.0
        %1686 = vmatpush1.xpose.msra.mxu0 0.0
        %1687 = vmatprep.subr.mxu0 0.0
        %1688 = vmatpush1.xpose.msra.mxu0 0.0
        %1689 = vmatprep.subr.mxu0 0.0
        %1690 = vmatpush1.xpose.msra.mxu0 0.0
        %1691 = vmatprep.subr.mxu0 0.0
        %1692 = vmatpush1.xpose.msra.mxu0 0.0
        %1693 = vmatprep.subr.mxu0 0.0
        %1694 = vmatpush1.xpose.msra.mxu0 0.0
        %1695 = vmatprep.subr.mxu0 0.0
        %1696 = vmatpush1.xpose.msra.mxu0 0.0
        %1697 = vmatprep.subr.mxu0 0.0
        %1698 = vmatpush1.xpose.msra.mxu0 %v1665
        %1699 = vmatprep.subr.mxu0 0.0
        %1700 = vmatpush2.xpose.msra.mxu0 0.0
        %1701 = vmatprep.subr.mxu0 0.0
        %1702 = vmatpush2.xpose.msra.mxu0 0.0
        %1703 = vmatprep.subr.mxu0 0.0
        %1704 = vmatpush2.xpose.msra.mxu0 0.0
        %1705 = vmatprep.subr.mxu0 0.0
        %1706 = vmatpush2.xpose.msra.mxu0 0.0
        %1707 = vmatprep.subr.mxu0 0.0
        %1708 = vmatpush2.xpose.msra.mxu0 0.0
        %1709 = vmatprep.subr.mxu0 0.0
        %1710 = vmatpush2.xpose.msra.mxu0 0.0
        %1711 = vmatprep.subr.mxu0 0.0
        %1712 = vmatpush2.xpose.msra.mxu0 0.0
        %1713 = vmatprep.subr.mxu0 0.0
        %1714 = vmatpush2.xpose.msra.mxu0 0.0
        %1715 = vmatprep.subr.mxu0 0.0
        %1716 = vmatpush2.xpose.msra.mxu0 0.0
        %1717 = vmatprep.subr.mxu0 0.0
        %1718 = vmatpush2.xpose.msra.mxu0 0.0
        %1719 = vmatprep.subr.mxu0 0.0
        %1720 = vmatpush2.xpose.msra.mxu0 0.0
        %1721 = vmatprep.subr.mxu0 0.0
        %1722 = vmatpush2.xpose.msra.mxu0 0.0
        %1723 = vmatprep.subr.mxu0 0.0
        %1724 = vmatpush2.xpose.msra.mxu0 0.0
        %1725 = vmatprep.subr.mxu0 0.0
        %1726 = vmatpush2.xpose.msra.mxu0 0.0
        %1727 = vmatprep.subr.mxu0 0.0
        %1728 = vmatpush2.xpose.msra.mxu0 0.0
        %1729 = vmatprep.subr.mxu0 0.0
        %1730 = vmatpush2.xpose.msra.mxu0 0.0
        %1731 = vmatprep.mubr.f32.mxu0 0.0
        %1732 = vmatmul.mubr.f32.gmra.mxu0 %v1663
        %v1733 = vpop.f32.mrf.mxu0
        %v1734 = vadd.f32 0.0, %v1733
        %v1735 = vpop.f32.mrf.mxu0
        %1736 = vdwg.mxu0
        %v1737 = vsel %vm1278, %v1734, -inf
        %v1738 = vld [vmem:[#allocation4] sm:$0xff]
        %v1739 = vsel %vm1279, %v1737, -inf
        %1740 = vmax.xlane.f32.xlu0 %v1739
        %v1741 = vpop.xlane.xlu0 %1740
        %v1742 = vmax.f32 %v1738, %v1741
        %v1743 = vsub.f32 %v1738, %v1742
        %v1744 = vmul.f32 %v1743, 1.442695
        %v1745 = vpow.pop %v1744
        %1747 = vset.pattern.permute.xlu0 2
        %1748 = vperm.xlu0 %1747, %v1742
        %v1749 = vpop.permute.xlu0 %1748
        %v1751 = vsub.f32 %v1737, %v1749
        %v1752 = vmul.f32 %v1751, 1.442695
        %v1753 = vpow.pop %v1752
        %v1754 = vld [vmem:[#allocation5] sm:$0xff]
        %v1755 = vmul.f32 %v1745, %v1754
        %v1756 = vsel %vm1279, %v1753, 0.0
        %1757 = vadd.xlane.f32.xlu0 %v1756
        %v1758 = vpop.xlane.xlu0 %1757
        %v1759 = vadd.f32 %v1755, %v1758
        %vm1760 = vcmask 23568
        %1761 = vst.msk [vmem:[#allocation5] sm:$0xff] %vm1760, %v1759
        %v1762 = vld [vmem:[#allocation6] sm:$0xff]
        %1764 = vset.pattern.permute.xlu0 2
        %1765 = vperm.xlu0 %1764, %v1745
        %v1766 = vpop.permute.xlu0 %1765
        %v1768 = vmul.f32 %v1766, %v1762
        %1769 = vrot.lane.b32.xlu0 %v1269, 112
        %v1770 = vpop.permute.xlu0 %1769
        %v1773 = vsel %vm1279, %v1753, 0
        %1775 = vmatprep.subr.mxu0 0.0
        %1776 = vmatpush1.msra.mxu0 0.0
        %1777 = vmatprep.subr.mxu0 0.0
        %1778 = vmatpush1.msra.mxu0 0.0
        %1779 = vmatprep.subr.mxu0 0.0
        %1780 = vmatpush1.msra.mxu0 0.0
        %1781 = vmatprep.subr.mxu0 0.0
        %1782 = vmatpush1.msra.mxu0 0.0
        %1783 = vmatprep.subr.mxu0 0.0
        %1784 = vmatpush1.msra.mxu0 0.0
        %1785 = vmatprep.subr.mxu0 0.0
        %1786 = vmatpush1.msra.mxu0 0.0
        %1787 = vmatprep.subr.mxu0 0.0
        %1788 = vmatpush1.msra.mxu0 0.0
        %1789 = vmatprep.subr.mxu0 0.0
        %1790 = vmatpush1.msra.mxu0 0.0
        %1791 = vmatprep.subr.mxu0 0.0
        %1792 = vmatpush1.msra.mxu0 0.0
        %1793 = vmatprep.subr.mxu0 0.0
        %1794 = vmatpush1.msra.mxu0 0.0
        %1795 = vmatprep.subr.mxu0 0.0
        %1796 = vmatpush1.msra.mxu0 0.0
        %1797 = vmatprep.subr.mxu0 0.0
        %1798 = vmatpush1.msra.mxu0 0.0
        %1799 = vmatprep.subr.mxu0 0.0
        %1800 = vmatpush1.msra.mxu0 0.0
        %1801 = vmatprep.subr.mxu0 0.0
        %1802 = vmatpush1.msra.mxu0 0.0
        %1803 = vmatprep.subr.mxu0 0.0
        %1804 = vmatpush1.msra.mxu0 0.0
        %1805 = vmatprep.subr.mxu0 0.0
        %1806 = vmatpush1.msra.mxu0 %v1770
        %1807 = vmatprep.subr.mxu0 0.0
        %1808 = vmatpush2.msra.mxu0 0.0
        %1809 = vmatprep.subr.mxu0 0.0
        %1810 = vmatpush2.msra.mxu0 0.0
        %1811 = vmatprep.subr.mxu0 0.0
        %1812 = vmatpush2.msra.mxu0 0.0
        %1813 = vmatprep.subr.mxu0 0.0
        %1814 = vmatpush2.msra.mxu0 0.0
        %1815 = vmatprep.subr.mxu0 0.0
        %1816 = vmatpush2.msra.mxu0 0.0
        %1817 = vmatprep.subr.mxu0 0.0
        %1818 = vmatpush2.msra.mxu0 0.0
        %1819 = vmatprep.subr.mxu0 0.0
        %1820 = vmatpush2.msra.mxu0 0.0
        %1821 = vmatprep.subr.mxu0 0.0
        %1822 = vmatpush2.msra.mxu0 0.0
        %1823 = vmatprep.subr.mxu0 0.0
        %1824 = vmatpush2.msra.mxu0 0.0
        %1825 = vmatprep.subr.mxu0 0.0
        %1826 = vmatpush2.msra.mxu0 0.0
        %1827 = vmatprep.subr.mxu0 0.0
        %1828 = vmatpush2.msra.mxu0 0.0
        %1829 = vmatprep.subr.mxu0 0.0
        %1830 = vmatpush2.msra.mxu0 0.0
        %1831 = vmatprep.subr.mxu0 0.0
        %1832 = vmatpush2.msra.mxu0 0.0
        %1833 = vmatprep.subr.mxu0 0.0
        %1834 = vmatpush2.msra.mxu0 0.0
        %1835 = vmatprep.subr.mxu0 0.0
        %1836 = vmatpush2.msra.mxu0 0.0
        %1837 = vmatprep.subr.mxu0 0.0
        %1838 = vmatpush2.msra.mxu0 0.0
        %1839 = vmatprep.mubr.f32.mxu0 0.0
        %1840 = vmatmul.mubr.f32.gmra.mxu0 %v1773
        %v1841 = vpop.f32.mrf.mxu0
        %v1842 = vadd.f32 0.0, %v1841
        %v1843 = vpop.f32.mrf.mxu0
        %1844 = vdwg.mxu0
        %1846 = vrot.lane.b32.xlu0 %v1842, 16
        %v1847 = vpop.permute.xlu0 %1846
        %v1849 = vadd.f32 %v1768, %v1847
        %vm1850 = vcmask 195712
        %1851 = vst.msk [vmem:[#allocation6] sm:$0xff] %vm1850, %v1849
        %1852 = vst.msk [vmem:[#allocation4] sm:$0xff] %vm1760, %v1742
        %1853 = vrot.lane.b32.xlu0 %v486, 104
        %v1854 = vpop.permute.xlu0 %1853
        %1855 = vrot.lane.b32.xlu0 %v1267, 104
        %v1856 = vpop.permute.xlu0 %1855
        %v1857 = vsel %vm1279, %v1854, 0
        %v1859 = vsel %vm1279, %v1856, 0
        %1861 = vmatprep.subr.mxu0 0.0
        %1862 = vmatpush1.xpose.msra.mxu0 0.0
        %1863 = vmatprep.subr.mxu0 0.0
        %1864 = vmatpush1.xpose.msra.mxu0 0.0
        %1865 = vmatprep.subr.mxu0 0.0
        %1866 = vmatpush1.xpose.msra.mxu0 0.0
        %1867 = vmatprep.subr.mxu0 0.0
        %1868 = vmatpush1.xpose.msra.mxu0 0.0
        %1869 = vmatprep.subr.mxu0 0.0
        %1870 = vmatpush1.xpose.msra.mxu0 0.0
        %1871 = vmatprep.subr.mxu0 0.0
        %1872 = vmatpush1.xpose.msra.mxu0 0.0
        %1873 = vmatprep.subr.mxu0 0.0
        %1874 = vmatpush1.xpose.msra.mxu0 0.0
        %1875 = vmatprep.subr.mxu0 0.0
        %1876 = vmatpush1.xpose.msra.mxu0 0.0
        %1877 = vmatprep.subr.mxu0 0.0
        %1878 = vmatpush1.xpose.msra.mxu0 0.0
        %1879 = vmatprep.subr.mxu0 0.0
        %1880 = vmatpush1.xpose.msra.mxu0 0.0
        %1881 = vmatprep.subr.mxu0 0.0
        %1882 = vmatpush1.xpose.msra.mxu0 0.0
        %1883 = vmatprep.subr.mxu0 0.0
        %1884 = vmatpush1.xpose.msra.mxu0 0.0
        %1885 = vmatprep.subr.mxu0 0.0
        %1886 = vmatpush1.xpose.msra.mxu0 0.0
        %1887 = vmatprep.subr.mxu0 0.0
        %1888 = vmatpush1.xpose.msra.mxu0 0.0
        %1889 = vmatprep.subr.mxu0 0.0
        %1890 = vmatpush1.xpose.msra.mxu0 0.0
        %1891 = vmatprep.subr.mxu0 0.0
        %1892 = vmatpush1.xpose.msra.mxu0 %v1859
        %1893 = vmatprep.subr.mxu0 0.0
        %1894 = vmatpush2.xpose.msra.mxu0 0.0
        %1895 = vmatprep.subr.mxu0 0.0
        %1896 = vmatpush2.xpose.msra.mxu0 0.0
        %1897 = vmatprep.subr.mxu0 0.0
        %1898 = vmatpush2.xpose.msra.mxu0 0.0
        %1899 = vmatprep.subr.mxu0 0.0
        %1900 = vmatpush2.xpose.msra.mxu0 0.0
        %1901 = vmatprep.subr.mxu0 0.0
        %1902 = vmatpush2.xpose.msra.mxu0 0.0
        %1903 = vmatprep.subr.mxu0 0.0
        %1904 = vmatpush2.xpose.msra.mxu0 0.0
        %1905 = vmatprep.subr.mxu0 0.0
        %1906 = vmatpush2.xpose.msra.mxu0 0.0
        %1907 = vmatprep.subr.mxu0 0.0
        %1908 = vmatpush2.xpose.msra.mxu0 0.0
        %1909 = vmatprep.subr.mxu0 0.0
        %1910 = vmatpush2.xpose.msra.mxu0 0.0
        %1911 = vmatprep.subr.mxu0 0.0
        %1912 = vmatpush2.xpose.msra.mxu0 0.0
        %1913 = vmatprep.subr.mxu0 0.0
        %1914 = vmatpush2.xpose.msra.mxu0 0.0
        %1915 = vmatprep.subr.mxu0 0.0
        %1916 = vmatpush2.xpose.msra.mxu0 0.0
        %1917 = vmatprep.subr.mxu0 0.0
        %1918 = vmatpush2.xpose.msra.mxu0 0.0
        %1919 = vmatprep.subr.mxu0 0.0
        %1920 = vmatpush2.xpose.msra.mxu0 0.0
        %1921 = vmatprep.subr.mxu0 0.0
        %1922 = vmatpush2.xpose.msra.mxu0 0.0
        %1923 = vmatprep.subr.mxu0 0.0
        %1924 = vmatpush2.xpose.msra.mxu0 0.0
        %1925 = vmatprep.mubr.f32.mxu0 0.0
        %1926 = vmatmul.mubr.f32.gmra.mxu0 %v1857
        %v1927 = vpop.f32.mrf.mxu0
        %v1928 = vadd.f32 0.0, %v1927
        %v1929 = vpop.f32.mrf.mxu0
        %1930 = vdwg.mxu0
        %v1931 = vsel %vm1278, %v1928, -inf
        %v1932 = vld [vmem:[#allocation4] sm:$0xff]
        %v1933 = vsel %vm1279, %v1931, -inf
        %1934 = vmax.xlane.f32.xlu0 %v1933
        %v1935 = vpop.xlane.xlu0 %1934
        %v1936 = vmax.f32 %v1932, %v1935
        %v1937 = vsub.f32 %v1932, %v1936
        %v1938 = vmul.f32 %v1937, 1.442695
        %v1939 = vpow.pop %v1938
        %1941 = vset.pattern.permute.xlu0 3
        %1942 = vperm.xlu0 %1941, %v1936
        %v1943 = vpop.permute.xlu0 %1942
        %v1945 = vsub.f32 %v1931, %v1943
        %v1946 = vmul.f32 %v1945, 1.442695
        %v1947 = vpow.pop %v1946
        %v1948 = vld [vmem:[#allocation5] sm:$0xff]
        %v1949 = vmul.f32 %v1939, %v1948
        %v1950 = vsel %vm1279, %v1947, 0.0
        %1951 = vadd.xlane.f32.xlu0 %v1950
        %v1952 = vpop.xlane.xlu0 %1951
        %v1953 = vadd.f32 %v1949, %v1952
        %vm1954 = vcmask 31768
        %1955 = vst.msk [vmem:[#allocation5] sm:$0xff] %vm1954, %v1953
        %v1956 = vld [vmem:[#allocation6] sm:$0xff]
        %1958 = vset.pattern.permute.xlu0 3
        %1959 = vperm.xlu0 %1958, %v1939
        %v1960 = vpop.permute.xlu0 %1959
        %v1962 = vmul.f32 %v1960, %v1956
        %1963 = vrot.lane.b32.xlu0 %v1269, 104
        %v1964 = vpop.permute.xlu0 %1963
        %v1967 = vsel %vm1279, %v1947, 0
        %1969 = vmatprep.subr.mxu0 0.0
        %1970 = vmatpush1.msra.mxu0 0.0
        %1971 = vmatprep.subr.mxu0 0.0
        %1972 = vmatpush1.msra.mxu0 0.0
        %1973 = vmatprep.subr.mxu0 0.0
        %1974 = vmatpush1.msra.mxu0 0.0
        %1975 = vmatprep.subr.mxu0 0.0
        %1976 = vmatpush1.msra.mxu0 0.0
        %1977 = vmatprep.subr.mxu0 0.0
        %1978 = vmatpush1.msra.mxu0 0.0
        %1979 = vmatprep.subr.mxu0 0.0
        %1980 = vmatpush1.msra.mxu0 0.0
        %1981 = vmatprep.subr.mxu0 0.0
        %1982 = vmatpush1.msra.mxu0 0.0
        %1983 = vmatprep.subr.mxu0 0.0
        %1984 = vmatpush1.msra.mxu0 0.0
        %1985 = vmatprep.subr.mxu0 0.0
        %1986 = vmatpush1.msra.mxu0 0.0
        %1987 = vmatprep.subr.mxu0 0.0
        %1988 = vmatpush1.msra.mxu0 0.0
        %1989 = vmatprep.subr.mxu0 0.0
        %1990 = vmatpush1.msra.mxu0 0.0
        %1991 = vmatprep.subr.mxu0 0.0
        %1992 = vmatpush1.msra.mxu0 0.0
        %1993 = vmatprep.subr.mxu0 0.0
        %1994 = vmatpush1.msra.mxu0 0.0
        %1995 = vmatprep.subr.mxu0 0.0
        %1996 = vmatpush1.msra.mxu0 0.0
        %1997 = vmatprep.subr.mxu0 0.0
        %1998 = vmatpush1.msra.mxu0 0.0
        %1999 = vmatprep.subr.mxu0 0.0
        %2000 = vmatpush1.msra.mxu0 %v1964
        %2001 = vmatprep.subr.mxu0 0.0
        %2002 = vmatpush2.msra.mxu0 0.0
        %2003 = vmatprep.subr.mxu0 0.0
        %2004 = vmatpush2.msra.mxu0 0.0
        %2005 = vmatprep.subr.mxu0 0.0
        %2006 = vmatpush2.msra.mxu0 0.0
        %2007 = vmatprep.subr.mxu0 0.0
        %2008 = vmatpush2.msra.mxu0 0.0
        %2009 = vmatprep.subr.mxu0 0.0
        %2010 = vmatpush2.msra.mxu0 0.0
        %2011 = vmatprep.subr.mxu0 0.0
        %2012 = vmatpush2.msra.mxu0 0.0
        %2013 = vmatprep.subr.mxu0 0.0
        %2014 = vmatpush2.msra.mxu0 0.0
        %2015 = vmatprep.subr.mxu0 0.0
        %2016 = vmatpush2.msra.mxu0 0.0
        %2017 = vmatprep.subr.mxu0 0.0
        %2018 = vmatpush2.msra.mxu0 0.0
        %2019 = vmatprep.subr.mxu0 0.0
        %2020 = vmatpush2.msra.mxu0 0.0
        %2021 = vmatprep.subr.mxu0 0.0
        %2022 = vmatpush2.msra.mxu0 0.0
        %2023 = vmatprep.subr.mxu0 0.0
        %2024 = vmatpush2.msra.mxu0 0.0
        %2025 = vmatprep.subr.mxu0 0.0
        %2026 = vmatpush2.msra.mxu0 0.0
        %2027 = vmatprep.subr.mxu0 0.0
        %2028 = vmatpush2.msra.mxu0 0.0
        %2029 = vmatprep.subr.mxu0 0.0
        %2030 = vmatpush2.msra.mxu0 0.0
        %2031 = vmatprep.subr.mxu0 0.0
        %2032 = vmatpush2.msra.mxu0 0.0
        %2033 = vmatprep.mubr.f32.mxu0 0.0
        %2034 = vmatmul.mubr.f32.gmra.mxu0 %v1967
        %v2035 = vpop.f32.mrf.mxu0
        %v2036 = vadd.f32 0.0, %v2035
        %v2037 = vpop.f32.mrf.mxu0
        %2038 = vdwg.mxu0
        %2040 = vrot.lane.b32.xlu0 %v2036, 24
        %v2041 = vpop.permute.xlu0 %2040
        %v2043 = vadd.f32 %v1962, %v2041
        %vm2044 = vcmask 261312
        %2045 = vst.msk [vmem:[#allocation6] sm:$0xff] %vm2044, %v2043
        %2046 = vst.msk [vmem:[#allocation4] sm:$0xff] %vm1954, %v1936
        %v2047 = vld [vmem:[#allocation5] sm:$0xff]
        %v2048 = vrcp.pop %v2047
        %v2049 = vld [vmem:[#allocation6] sm:$0xff]
        %2051 = vset.pattern.permute.xlu0 0
        %2052 = vperm.xlu0 %2051, %v2048
        %v2053 = vpop.permute.xlu0 %2052
        %v2055 = vmul.f32 %v2049, %v2053
        %2056 = vst.msk [vmem:[#allocation6] sm:$0xff] %vm1279, %v2055
        %v2057 = vld [vmem:[#allocation6] sm:$0xff]
        %2058 = vset.pattern.permute.xlu0 1
        %2059 = vperm.xlu0 %2058, %v2048
        %v2060 = vpop.permute.xlu0 %2059
        %v2062 = vmul.f32 %v2057, %v2060
        %2063 = vst.msk [vmem:[#allocation6] sm:$0xff] %vm1656, %v2062
        %v2064 = vld [vmem:[#allocation6] sm:$0xff]
        %2065 = vset.pattern.permute.xlu0 2
        %2066 = vperm.xlu0 %2065, %v2048
        %v2067 = vpop.permute.xlu0 %2066
        %v2069 = vmul.f32 %v2064, %v2067
        %2070 = vst.msk [vmem:[#allocation6] sm:$0xff] %vm1850, %v2069
        %v2071 = vld [vmem:[#allocation6] sm:$0xff]
        %2072 = vset.pattern.permute.xlu0 3
        %2073 = vperm.xlu0 %2072, %v2048
        %v2074 = vpop.permute.xlu0 %2073
        %v2076 = vmul.f32 %v2071, %v2074
        %2077 = vst.msk [vmem:[#allocation6] sm:$0xff] %vm2044, %v2076
        %v2078 = vld [vmem:[#allocation6] sm:$0xff]
        %v2079 = vld [vmem:[#allocation13] sm:$0xff]
        %v2080 = vld [vmem:[#allocation13 + $0x8] sm:$0xff]
        %v2081 = vld [vmem:[#allocation13 + $0x10] sm:$0xff]
        %v2082 = vld [vmem:[#allocation13 + $0x18] sm:$0xff]
        %v2083 = vld [vmem:[%s4] sm:$0x1]
        %v2085 = vlaneseq
        %v2086 = vshrl.u32 %v2085, 7
        %v2087 = vsub.s32 0, %v2086
        %v2088 = vrot.slane %v2083, %v2087
        %v2091 = vsel %vm412, %v2078, 0
        %2093 = vmatprep.subr.mxu0 0.0
        %2094 = vmatpush1.msra.mxu0 0.0
        %2095 = vmatprep.subr.mxu0 0.0
        %2096 = vmatpush1.msra.mxu0 0.0
        %2097 = vmatprep.subr.mxu0 0.0
        %2098 = vmatpush1.msra.mxu0 0.0
        %2099 = vmatprep.subr.mxu0 0.0
        %2100 = vmatpush1.msra.mxu0 0.0
        %2101 = vmatprep.subr.mxu0 0.0
        %2102 = vmatpush1.msra.mxu0 0.0
        %2103 = vmatprep.subr.mxu0 0.0
        %2104 = vmatpush1.msra.mxu0 0.0
        %2105 = vmatprep.subr.mxu0 0.0
        %2106 = vmatpush1.msra.mxu0 0.0
        %2107 = vmatprep.subr.mxu0 0.0
        %2108 = vmatpush1.msra.mxu0 0.0
        %2109 = vmatprep.subr.mxu0 0.0
        %2110 = vmatpush1.msra.mxu0 0.0
        %2111 = vmatprep.subr.mxu0 0.0
        %2112 = vmatpush1.msra.mxu0 0.0
        %2113 = vmatprep.subr.mxu0 0.0
        %2114 = vmatpush1.msra.mxu0 0.0
        %2115 = vmatprep.subr.mxu0 0.0
        %2116 = vmatpush1.msra.mxu0 0.0
        %2117 = vmatprep.subr.mxu0 0.0
        %2118 = vmatpush1.msra.mxu0 %v2082
        %2119 = vmatprep.subr.mxu0 0.0
        %2120 = vmatpush1.msra.mxu0 %v2081
        %2121 = vmatprep.subr.mxu0 0.0
        %2122 = vmatpush1.msra.mxu0 %v2080
        %2123 = vmatprep.subr.mxu0 0.0
        %2124 = vmatpush1.msra.mxu0 %v2079
        %2125 = vmatprep.subr.mxu0 0.0
        %2126 = vmatpush2.msra.mxu0 0.0
        %2127 = vmatprep.subr.mxu0 0.0
        %2128 = vmatpush2.msra.mxu0 0.0
        %2129 = vmatprep.subr.mxu0 0.0
        %2130 = vmatpush2.msra.mxu0 0.0
        %2131 = vmatprep.subr.mxu0 0.0
        %2132 = vmatpush2.msra.mxu0 0.0
        %2133 = vmatprep.subr.mxu0 0.0
        %2134 = vmatpush2.msra.mxu0 0.0
        %2135 = vmatprep.subr.mxu0 0.0
        %2136 = vmatpush2.msra.mxu0 0.0
        %2137 = vmatprep.subr.mxu0 0.0
        %2138 = vmatpush2.msra.mxu0 0.0
        %2139 = vmatprep.subr.mxu0 0.0
        %2140 = vmatpush2.msra.mxu0 0.0
        %2141 = vmatprep.subr.mxu0 0.0
        %2142 = vmatpush2.msra.mxu0 0.0
        %2143 = vmatprep.subr.mxu0 0.0
        %2144 = vmatpush2.msra.mxu0 0.0
        %2145 = vmatprep.subr.mxu0 0.0
        %2146 = vmatpush2.msra.mxu0 0.0
        %2147 = vmatprep.subr.mxu0 0.0
        %2148 = vmatpush2.msra.mxu0 0.0
        %2149 = vmatprep.subr.mxu0 0.0
        %2150 = vmatpush2.msra.mxu0 0.0
        %2151 = vmatprep.subr.mxu0 0.0
        %2152 = vmatpush2.msra.mxu0 0.0
        %2153 = vmatprep.subr.mxu0 0.0
        %2154 = vmatpush2.msra.mxu0 0.0
        %2155 = vmatprep.subr.mxu0 0.0
        %2156 = vmatpush2.msra.mxu0 0.0
        %2157 = vmatprep.mubr.f32.mxu0 0.0
        %2158 = vmatmul.mubr.f32.gmra.mxu0 %v2091
        %v2159 = vpop.f32.mrf.mxu0
        %v2160 = vadd.f32 %v2088, %v2159
        %v2161 = vpop.f32.mrf.mxu0
        %2162 = vdwg.mxu0
        %2163 = vst.msk [vmem:[%s300] sm:$0xff] %vm412, %v2160
        %s2164 = sand.u32 %s156, 1
        %s2165 = scalar_lea.sflag [#allocation9], %s2164
        %s2166 = sand.u32 %s156, 1
        %s2167 = smul.addr %s2166, 8
        %s2168 = scalar_lea.vmem [#allocation15], %s2167
        // Predicated region
        $region68: #{tpu_custom_call.1} parent=39 // pred_check
          %p2169 = pneg %p166
        $region69: #{tpu_custom_call.1} parent=39 // pred_check_branch
          %2171 = sbr.rel (%p2169) target = $region71
        $region70: #{tpu_custom_call.1} parent=39 // pred_region
          %s2173 = ssub.s32 128, 128
          %2174 = vsyncadd %s2165, %s2173
          %s2175 = smul.addr %s28, 2
          %s2176 = sadd.s32 %s29, %s2175
          %s2177 = smul.addr %s2176, 128
          %s2178 = scalar_lea.hbm %s5, %s2177
          %s2180 = sshll.u32 %s2168, 4
          %s2181 = int_to_ptr.vmem [resolvable:$true] %s2180
          %2183 = dma.vmem_to_hbm [thread:$0]  %s2181, 128, %s2178, %s2165
        $region71: #{tpu_custom_call.1} parent=39 // pred_fallthru
          _
      $region40: #{tpu_custom_call.1} parent=5 // pred_fallthru
        _
      %p2184 = scmp.le.s32.totalorder 2, %s19
      // Predicated region
      $region72: #{tpu_custom_call.1} parent=5 // pred_check
        %p2185 = pneg %p2184
      $region73: #{tpu_custom_call.1} parent=5 // pred_check_branch
        %2187 = sbr.rel (%p2185) target = $region75
      $region74: #{tpu_custom_call.1} parent=5 // pred_region
        %s2188 = ssub.s32 %s19, 2
        // Predicated region
        $region76: #{tpu_custom_call.1} parent=74 // pred_check
          %p2189 = pneg %p172
        $region77: #{tpu_custom_call.1} parent=74 // pred_check_branch
          %2191 = sbr.rel (%p2189) target = $region79
        $region78: #{tpu_custom_call.1} parent=74 // pred_region
          %s2192 = sand.u32 %s157, 1
          %s2193 = scalar_lea.sflag [#allocation9], %s2192
          %s2194 = sand.u32 %s157, 1
          %s2195 = smul.addr %s2194, 8
          %s2196 = scalar_lea.vmem [#allocation15], %s2195
          %2197 = dma.done %s2193, 128
        $region79: #{tpu_custom_call.1} parent=74 // pred_fallthru
          _
      $region75: #{tpu_custom_call.1} parent=5 // pred_fallthru
        _
    $region6: #{tpu_custom_call.1} parent=1 // loop_footer
      %s23 = sadd.s32 1, %s19
    $region7: #{tpu_custom_call.1} parent=1 // loop_footer_branch
      %18 = sbr.rel target = $region3
    $region8: #{tpu_custom_call.1} parent=1 // loop_exit
      _
    %2198 = vsyncpa [#allocation8], 1
    %s2199 = scalar_lea.sflag [#allocation8], 1
    %2200 = vsyncpa %s2199, 1
    %2201 = vsyncpa [#allocation11], 1
    %2202 = vsyncpa [#allocation14], 1
    %2203 = vsyncpa [#allocation9], 1
    %s2204 = scalar_lea.sflag [#allocation9], 1
    %2205 = vsyncpa %s2204, 1

</llo_original>
